<compile_context>
chip_gen: v5e
topology: v5e:2x2
jax: 0.10.0
libtpu: 0.0.40
codegen_flags: <defaults>
</compile_context>

<pallas_src>
import functools
import math

import jax
import jax.numpy as jnp
from jax.experimental import pallas as pl
from jax.experimental.pallas import tpu as pltpu


def _patch_merge_kernel(x_ref, wg_ref, gws_ref, bw_ref, o_ref, *,
                        d0, d1, inv_k, eps):
    # x_ref:   (1, d0, th, d1, Wn, d2*C)  input block in the ORIGINAL layout
    # wg_ref:  (d0*d1, d2*C, OUT)         gamma-scaled reduction weight chunks
    # gws_ref: (1, OUT)                   gamma @ W   (f32)
    # bw_ref:  (1, OUT)                   beta  @ W   (f32)
    # o_ref:   (1, th*Wn, OUT)            lane-dense output block
    th = x_ref.shape[2]
    wn = x_ref.shape[4]
    rows = th * wn
    out_dim = o_ref.shape[2]

    acc = jnp.zeros((rows, out_dim), jnp.float32)
    ssum = jnp.zeros((rows, 1), jnp.float32)
    ssq = jnp.zeros((rows, 1), jnp.float32)

    # Unrolled loop over the d0*d1 (time, H-offset) slabs of the merged patch.
    # Each slab is a contiguous (w-offset, channel) chunk of the K features,
    # so no transpose is needed: the K-contraction is split across MXU dots.
    # NOTE: the slab reshape is a free view only when Wn % 8 == 0; otherwise
    # Mosaic inserts a sublane relayout copy per slab (correct, just slower).
    for i in range(d0):
        for j in range(d1):
            s = x_ref[0, i, :, j, :, :].reshape(rows, -1)        # (rows, d2*C)
            sf = s.astype(jnp.float32)
            ssum = ssum + jnp.sum(sf, axis=-1, keepdims=True)
            ssq = ssq + jnp.sum(sf * sf, axis=-1, keepdims=True)
            acc = acc + jnp.dot(s.astype(wg_ref.dtype), wg_ref[i * d1 + j],
                                preferred_element_type=jnp.float32)

    mean = ssum * inv_k
    var = ssq * inv_k - mean * mean          # one-pass biased variance (f32)
    inv = jax.lax.rsqrt(var + eps)
    res = (inv * acc
           - (inv * mean) * gws_ref[...].astype(jnp.float32)
           + bw_ref[...].astype(jnp.float32))
    o_ref[0] = res.astype(o_ref.dtype)       # direct store, no reshape needed


def patch_merging_3d(x, gamma, beta, w_t, *, downsample=(1, 2, 2), eps=1e-5,
                     target_block_bytes=2 << 20, mxu_dtype=None):
    """Forward pass of PatchMerging3D.

    x:     (B, T, H, W, C)
    gamma: (K,)      LayerNorm weight, K = d0*d1*d2*C
    beta:  (K,)      LayerNorm bias
    w_t:   (K, OUT)  reduction weight transposed (PyTorch weight is (OUT, K))
    mxu_dtype: optional matmul dtype (pass jnp.bfloat16 on v6e/v7x for the
               bf16 MXU fast path; LN stats / epilogue stay f32).
    returns (B, T//d0, H//d1, W//d2, OUT)
    """
    d0, d1, d2 = downsample
    B, T, H, W, C = x.shape
    # TODO(synk): the PyTorch module pads T/H/W (padding_type='nearest') when
    # not divisible by the downsample factor; divisible shapes required here.
    assert T % d0 == 0 and H % d1 == 0 and W % d2 == 0

    Tn, Hn, Wn = T // d0, H // d1, W // d2
    K = d0 * d1 * d2 * C
    OUT = w_t.shape[1]
    assert w_t.shape[0] == K and gamma.shape == (K,) and beta.shape == (K,)

    # ---- free (contiguous) reshape only: no data movement in HBM ----------
    xr = x.reshape(B * Tn, d0, Hn, d1, Wn, d2 * C)

    # ---- constant folding: LN gamma/beta merged into the reduction weight --
    w32 = w_t.astype(jnp.float32)
    g32 = gamma.astype(jnp.float32)
    mm_dtype = jnp.dtype(mxu_dtype) if mxu_dtype is not None else x.dtype
    wg = (g32[:, None] * w32).reshape(d0 * d1, d2 * C, OUT).astype(mm_dtype)
    gws = (g32 @ w32).reshape(1, OUT)                    # f32 epilogue consts
    bw = (beta.astype(jnp.float32) @ w32).reshape(1, OUT)

    # ---- H-block sizing: ~target_block_bytes of (padded) input per step ----
    sub, lane = 8, 128
    itemsize = jnp.dtype(x.dtype).itemsize
    pad_wn = -(-Wn // sub) * sub
    pad_dc = -(-(d2 * C) // lane) * lane
    row_bytes = max(1, d0 * d1 * pad_wn * pad_dc * itemsize)
    th = max(1, min(Hn, target_block_bytes // row_bytes))
    # keep the (th*Wn, OUT) output block 8-sublane aligned unless th == Hn
    m = 8 // math.gcd(Wn, 8)
    if th < Hn:
        th = max(m, (th // m) * m)
    th = min(th, Hn)
    # keep >= ~8 grid steps so v7x's two TensorCores both stay busy
    bt = B * Tn
    while th > m and bt * (-(-Hn // th)) < 8:
        th = max(m, ((th // 2) // m) * m)
    hb = -(-Hn // th)                 # ragged tail handled by block clipping
    grid = (bt, hb)

    n_vox = bt * Hn * Wn
    kernel = functools.partial(_patch_merge_kernel, d0=d0, d1=d1,
                               inv_k=1.0 / K, eps=eps)
    cost = pl.CostEstimate(
        flops=2 * n_vox * K * OUT + 6 * n_vox * K,
        transcendentals=n_vox,
        bytes_accessed=(xr.size * itemsize + wg.size * wg.dtype.itemsize
                        + n_vox * OUT * itemsize),
    )

    def _const_spec(shape, mode):
        idx = lambda n, h: (0,) * len(shape)
        if mode is None:
            return pl.BlockSpec(shape, idx)
        return pl.BlockSpec(shape, idx, pipeline_mode=mode)

    def _call(const_mode):
        return pl.pallas_call(
            kernel,
            out_shape=jax.ShapeDtypeStruct((bt, Hn * Wn, OUT), x.dtype),
            grid_spec=pltpu.PrefetchScalarGridSpec(
                num_scalar_prefetch=0,
                grid=grid,
                in_specs=[
                    # input block keeps the full trailing (Wn, d2*C) dims ->
                    # contiguous, lane-dense DMA straight from original layout
                    pl.BlockSpec((1, d0, th, d1, Wn, d2 * C),
                                 lambda n, h: (n, 0, h, 0, 0, 0)),
                    _const_spec((d0 * d1, d2 * C, OUT), const_mode),
                    _const_spec((1, OUT), const_mode),
                    _const_spec((1, OUT), const_mode),
                ],
                out_specs=pl.BlockSpec((1, th * Wn, OUT),
                                       lambda n, h: (n, h, 0)),
            ),
            compiler_params=pltpu.CompilerParams(
                dimension_semantics=("parallel", "parallel"),
                vmem_limit_bytes=32 * 1024 * 1024,
            ),
            cost_estimate=cost,
        )(xr, wg, gws, bw)

    try:
        # Single-buffer the grid-invariant operands (frees VMEM, esp. on v7x).
        out = _call(pl.Buffered(1))
    except Exception:  # pragma: no cover - jax without pipeline_mode support
        out = _call(None)

    return out.reshape(B, Tn, Hn, Wn, OUT)   # free contiguous reshape


def _reference(x, gamma, beta, w_t, downsample, eps=1e-5):
    d0, d1, d2 = downsample
    B, T, H, W, C = x.shape
    Tn, Hn, Wn = T // d0, H // d1, W // d2
    K = d0 * d1 * d2 * C
    xm = x.reshape(B, Tn, d0, Hn, d1, Wn, d2, C).transpose(0, 1, 3, 5, 2, 4, 6, 7)
    xm = xm.reshape(B, Tn, Hn, Wn, K).astype(jnp.float32)
    mean = xm.mean(-1, keepdims=True)
    var = ((xm - mean) ** 2).mean(-1, keepdims=True)
    xn = (xm - mean) * jax.lax.rsqrt(var + eps)
    xn = xn * gamma + beta
    return jnp.einsum("bthwk,ko->bthwo", xn, w_t.astype(jnp.float32))


if __name__ == "__main__":
    # Module config: dim=C=4, downsample=(1,2,2) -> K = 1*2*2*4 = 16,
    # out_dim = max(downsample)*dim = 8.
    B, T, H, W, C = 2, 4, 16, 16, 4
    downsample = (1, 2, 2)
    dim = C
    K = downsample[0] * downsample[1] * downsample[2] * dim
    out_dim = max(downsample) * dim

    key = jax.random.PRNGKey(0)
    kx, kw = jax.random.split(key)
    x = jax.random.normal(kx, (B, T, H, W, C), dtype=jnp.float32)

    # Deterministic synthetic parameters (not a checkpoint):
    #   nn.Linear(K, out_dim, bias=False).weight has shape (out_dim, K);
    #   we keep its transpose (K, out_dim) so the kernel computes x @ W^T.
    w = 0.02 * jax.random.normal(kw, (out_dim, K), dtype=jnp.float32)
    w_t = w.T
    gamma = jnp.ones((K,), dtype=jnp.float32)   # LayerNorm weight init ('0')
    beta = jnp.zeros((K,), dtype=jnp.float32)   # LayerNorm bias init

    ref = _reference(x, gamma, beta, w_t, downsample)
    expected_shape = (B, T // downsample[0], H // downsample[1],
                      W // downsample[2], out_dim)

    # f32 path (exact vs reference)
    out = patch_merging_3d(x, gamma, beta, w_t, downsample=downsample)
    out = jax.block_until_ready(out)
    assert out.shape == expected_shape, out.shape
    assert jnp.allclose(out, ref, atol=1e-4, rtol=1e-4), float(
        jnp.max(jnp.abs(out - ref)))

    # bf16 MXU fast path (v6e/v7x recommendation): bf16 activations + weights,
    # f32 accumulation/stats — looser tolerance vs the f32 reference.
    out_bf16 = patch_merging_3d(x.astype(jnp.bfloat16), gamma, beta, w_t,
                                downsample=downsample,
                                mxu_dtype=jnp.bfloat16)
    out_bf16 = jax.block_until_ready(out_bf16)
    assert out_bf16.shape == expected_shape, out_bf16.shape
    assert jnp.allclose(out_bf16.astype(jnp.float32), ref,
                        atol=3e-2, rtol=3e-2), float(
        jnp.max(jnp.abs(out_bf16.astype(jnp.float32) - ref)))

    print("KERNEL_OK")
</pallas_src>

<mosaic_0001>
module attributes {stable_mosaic.version = 11 : i64} {
  func.func @_patch_merge_kernel(%arg0: i32, %arg1: i32, %arg2: memref<1x1x8x2x8x8xf32, #tpu.memory_space<vmem>>, %arg3: memref<2x8x8xf32, #tpu.memory_space<vmem>>, %arg4: memref<1x8xf32, #tpu.memory_space<vmem>>, %arg5: memref<1x8xf32, #tpu.memory_space<vmem>>, %arg6: memref<1x64x8xf32, #tpu.memory_space<vmem>>) attributes {dimension_semantics = [#tpu.dimension_semantics<parallel>, #tpu.dimension_semantics<parallel>], iteration_bounds = array<i64: 8, 1>, scalar_prefetch = 0 : i64, scratch_operands = 0 : i64, tpu.core_type = #tpu.core_type<tc>, window_params = [{transform_indices = @transform_0, window_bounds = array<i64: 1, 1, 8, 2, 8, 8>}, {pipeline_mode = #tpu.pipeline_mode<synchronous>, transform_indices = @transform_1, window_bounds = array<i64: 2, 8, 8>}, {pipeline_mode = #tpu.pipeline_mode<synchronous>, transform_indices = @transform_2, window_bounds = array<i64: 1, 8>}, {pipeline_mode = #tpu.pipeline_mode<synchronous>, transform_indices = @transform_3, window_bounds = array<i64: 1, 8>}, {transform_indices = @transform_4, window_bounds = array<i64: 1, 64, 8>}]} {
    %cst = arith.constant 0.000000e+00 : f32
    %0 = vector.broadcast %cst : f32 to vector<64x8xf32>
    %cst_0 = arith.constant 0.000000e+00 : f32
    %1 = vector.broadcast %cst_0 : f32 to vector<64x1xf32>
    %cst_1 = arith.constant 0.000000e+00 : f32
    %2 = vector.broadcast %cst_1 : f32 to vector<64x1xf32>
    %c0 = arith.constant 0 : index
    %c0_2 = arith.constant 0 : index
    %c0_3 = arith.constant 0 : index
    %c0_4 = arith.constant 0 : index
    %c0_5 = arith.constant 0 : index
    %c0_6 = arith.constant 0 : index
    %3 = vector.load %arg2[%c0, %c0_2, %c0_3, %c0_4, %c0_5, %c0_6] : memref<1x1x8x2x8x8xf32, #tpu.memory_space<vmem>>, vector<1x1x8x1x8x8xf32>
    %4 = vector.shape_cast %3 : vector<1x1x8x1x8x8xf32> to vector<8x8x8xf32>
    %5 = vector.shape_cast %4 : vector<8x8x8xf32> to vector<64x8xf32>
    %cst_7 = arith.constant dense<0.000000e+00> : vector<64xf32>
    %6 = vector.multi_reduction <add>, %5, %cst_7 [1] : vector<64x8xf32> to vector<64xf32>
    %7 = vector.shape_cast %6 : vector<64xf32> to vector<64x1xf32>
    %8 = arith.addf %1, %7 : vector<64x1xf32>
    %9 = arith.mulf %5, %5 : vector<64x8xf32>
    %cst_8 = arith.constant dense<0.000000e+00> : vector<64xf32>
    %10 = vector.multi_reduction <add>, %9, %cst_8 [1] : vector<64x8xf32> to vector<64xf32>
    %11 = vector.shape_cast %10 : vector<64xf32> to vector<64x1xf32>
    %12 = arith.addf %2, %11 : vector<64x1xf32>
    %c0_9 = arith.constant 0 : index
    %c0_10 = arith.constant 0 : index
    %c0_11 = arith.constant 0 : index
    %13 = vector.load %arg3[%c0_9, %c0_10, %c0_11] : memref<2x8x8xf32, #tpu.memory_space<vmem>>, vector<1x8x8xf32>
    %14 = vector.shape_cast %13 : vector<1x8x8xf32> to vector<8x8xf32>
    %cst_12 = arith.constant dense<0.000000e+00> : vector<64x8xf32>
    %15 = tpu.matmul %5, %14, %cst_12 {dimension_numbers = #tpu.dot_dimension_numbers<[1], [0], [0], [1], [0, 0, 1, 1], [], []>} : vector<64x8xf32>, vector<8x8xf32>, vector<64x8xf32> -> vector<64x8xf32>
    %16 = arith.addf %0, %15 : vector<64x8xf32>
    %c0_13 = arith.constant 0 : index
    %c0_14 = arith.constant 0 : index
    %c0_15 = arith.constant 0 : index
    %c1 = arith.constant 1 : index
    %c0_16 = arith.constant 0 : index
    %c0_17 = arith.constant 0 : index
    %17 = vector.load %arg2[%c0_13, %c0_14, %c0_15, %c1, %c0_16, %c0_17] : memref<1x1x8x2x8x8xf32, #tpu.memory_space<vmem>>, vector<1x1x8x1x8x8xf32>
    %18 = vector.shape_cast %17 : vector<1x1x8x1x8x8xf32> to vector<8x8x8xf32>
    %19 = vector.shape_cast %18 : vector<8x8x8xf32> to vector<64x8xf32>
    %cst_18 = arith.constant dense<0.000000e+00> : vector<64xf32>
    %20 = vector.multi_reduction <add>, %19, %cst_18 [1] : vector<64x8xf32> to vector<64xf32>
    %21 = vector.shape_cast %20 : vector<64xf32> to vector<64x1xf32>
    %22 = arith.addf %8, %21 : vector<64x1xf32>
    %23 = arith.mulf %19, %19 : vector<64x8xf32>
    %cst_19 = arith.constant dense<0.000000e+00> : vector<64xf32>
    %24 = vector.multi_reduction <add>, %23, %cst_19 [1] : vector<64x8xf32> to vector<64xf32>
    %25 = vector.shape_cast %24 : vector<64xf32> to vector<64x1xf32>
    %26 = arith.addf %12, %25 : vector<64x1xf32>
    %c1_20 = arith.constant 1 : index
    %c0_21 = arith.constant 0 : index
    %c0_22 = arith.constant 0 : index
    %27 = vector.load %arg3[%c1_20, %c0_21, %c0_22] : memref<2x8x8xf32, #tpu.memory_space<vmem>>, vector<1x8x8xf32>
    %28 = vector.shape_cast %27 : vector<1x8x8xf32> to vector<8x8xf32>
    %cst_23 = arith.constant dense<0.000000e+00> : vector<64x8xf32>
    %29 = tpu.matmul %19, %28, %cst_23 {dimension_numbers = #tpu.dot_dimension_numbers<[1], [0], [0], [1], [0, 0, 1, 1], [], []>} : vector<64x8xf32>, vector<8x8xf32>, vector<64x8xf32> -> vector<64x8xf32>
    %30 = arith.addf %16, %29 : vector<64x8xf32>
    %cst_24 = arith.constant 6.250000e-02 : f32
    %31 = vector.broadcast %cst_24 : f32 to vector<64x1xf32>
    %32 = arith.mulf %22, %31 : vector<64x1xf32>
    %cst_25 = arith.constant 6.250000e-02 : f32
    %33 = vector.broadcast %cst_25 : f32 to vector<64x1xf32>
    %34 = arith.mulf %26, %33 : vector<64x1xf32>
    %35 = arith.mulf %32, %32 : vector<64x1xf32>
    %36 = arith.subf %34, %35 : vector<64x1xf32>
    %cst_26 = arith.constant 9.99999974E-6 : f32
    %37 = vector.broadcast %cst_26 : f32 to vector<64x1xf32>
    %38 = arith.addf %36, %37 : vector<64x1xf32>
    %39 = math.rsqrt %38 : vector<64x1xf32>
    %40 = vector.broadcast %39 : vector<64x1xf32> to vector<64x8xf32>
    %41 = arith.mulf %40, %30 : vector<64x8xf32>
    %42 = arith.mulf %39, %32 : vector<64x1xf32>
    %c0_27 = arith.constant 0 : index
    %c0_28 = arith.constant 0 : index
    %43 = vector.load %arg4[%c0_27, %c0_28] : memref<1x8xf32, #tpu.memory_space<vmem>>, vector<1x8xf32>
    %44 = vector.broadcast %42 : vector<64x1xf32> to vector<64x8xf32>
    %45 = vector.broadcast %43 : vector<1x8xf32> to vector<64x8xf32>
    %46 = arith.mulf %44, %45 : vector<64x8xf32>
    %47 = arith.subf %41, %46 : vector<64x8xf32>
    %c0_29 = arith.constant 0 : index
    %c0_30 = arith.constant 0 : index
    %48 = vector.load %arg5[%c0_29, %c0_30] : memref<1x8xf32, #tpu.memory_space<vmem>>, vector<1x8xf32>
    %49 = vector.broadcast %48 : vector<1x8xf32> to vector<64x8xf32>
    %50 = arith.addf %47, %49 : vector<64x8xf32>
    %c0_31 = arith.constant 0 : index
    %c0_32 = arith.constant 0 : index
    %c0_33 = arith.constant 0 : index
    %51 = vector.load %arg6[%c0_31, %c0_32, %c0_33] : memref<1x64x8xf32, #tpu.memory_space<vmem>>, vector<1x64x8xf32>
    %52 = vector.shape_cast %51 : vector<1x64x8xf32> to vector<64x8xf32>
    %53 = vector.shape_cast %50 : vector<64x8xf32> to vector<1x64x8xf32>
    tpu.vector_store %arg6[%c0_31, %c0_32, %c0_33], %53 {strides = array<i32>} : memref<1x64x8xf32, #tpu.memory_space<vmem>>, vector<1x64x8xf32>,
    return
  }
  func.func @transform_0(%arg0: i32, %arg1: i32) -> (i32, i32, i32, i32, i32, i32) {
    %c0_i32 = arith.constant 0 : i32
    %c0_i32_0 = arith.constant 0 : i32
    %c0_i32_1 = arith.constant 0 : i32
    %c0_i32_2 = arith.constant 0 : i32
    %c0_i32_3 = arith.constant 0 : i32
    return %arg0, %c0_i32, %arg1, %c0_i32_0, %c0_i32_1, %c0_i32_2 : i32, i32, i32, i32, i32, i32
  }
  func.func @transform_1(%arg0: i32, %arg1: i32) -> (i32, i32, i32) {
    %c0_i32 = arith.constant 0 : i32
    %c0_i32_0 = arith.constant 0 : i32
    %c0_i32_1 = arith.constant 0 : i32
    %c0_i32_2 = arith.constant 0 : i32
    return %c0_i32, %c0_i32_0, %c0_i32_1 : i32, i32, i32
  }
  func.func @transform_2(%arg0: i32, %arg1: i32) -> (i32, i32) {
    %c0_i32 = arith.constant 0 : i32
    %c0_i32_0 = arith.constant 0 : i32
    %c0_i32_1 = arith.constant 0 : i32
    return %c0_i32, %c0_i32_0 : i32, i32
  }
  func.func @transform_3(%arg0: i32, %arg1: i32) -> (i32, i32) {
    %c0_i32 = arith.constant 0 : i32
    %c0_i32_0 = arith.constant 0 : i32
    %c0_i32_1 = arith.constant 0 : i32
    return %c0_i32, %c0_i32_0 : i32, i32
  }
  func.func @transform_4(%arg0: i32, %arg1: i32) -> (i32, i32, i32) {
    %c0_i32 = arith.constant 0 : i32
    %c0_i32_0 = arith.constant 0 : i32
    return %arg0, %arg1, %c0_i32 : i32, i32, i32
  }
}

module attributes {stable_mosaic.version = 11 : i64} {
  func.func @_patch_merge_kernel(%arg0: i32, %arg1: i32, %arg2: memref<1x1x8x2x8x8xf32, #tpu.memory_space<vmem>>, %arg3: memref<2x8x8xf32, #tpu.memory_space<vmem>>, %arg4: memref<1x8xf32, #tpu.memory_space<vmem>>, %arg5: memref<1x8xf32, #tpu.memory_space<vmem>>, %arg6: memref<1x64x8xf32, #tpu.memory_space<vmem>>) attributes {dimension_semantics = [#tpu.dimension_semantics<parallel>, #tpu.dimension_semantics<parallel>], iteration_bounds = array<i64: 8, 1>, scalar_prefetch = 0 : i64, scratch_operands = 0 : i64, tpu.core_type = #tpu.core_type<tc>, window_params = [{transform_indices = @transform_0, window_bounds = array<i64: 1, 1, 8, 2, 8, 8>}, {pipeline_mode = #tpu.pipeline_mode<synchronous>, transform_indices = @transform_1, window_bounds = array<i64: 2, 8, 8>}, {pipeline_mode = #tpu.pipeline_mode<synchronous>, transform_indices = @transform_2, window_bounds = array<i64: 1, 8>}, {pipeline_mode = #tpu.pipeline_mode<synchronous>, transform_indices = @transform_3, window_bounds = array<i64: 1, 8>}, {transform_indices = @transform_4, window_bounds = array<i64: 1, 64, 8>}]} {
    %cst = arith.constant 0.000000e+00 : f32
    %0 = vector.broadcast %cst : f32 to vector<64x8xf32>
    %cst_0 = arith.constant 0.000000e+00 : f32
    %1 = vector.broadcast %cst_0 : f32 to vector<64x1xf32>
    %cst_1 = arith.constant 0.000000e+00 : f32
    %2 = vector.broadcast %cst_1 : f32 to vector<64x1xf32>
    %c0 = arith.constant 0 : index
    %c0_2 = arith.constant 0 : index
    %c0_3 = arith.constant 0 : index
    %c0_4 = arith.constant 0 : index
    %c0_5 = arith.constant 0 : index
    %c0_6 = arith.constant 0 : index
    %3 = vector.load %arg2[%c0, %c0_2, %c0_3, %c0_4, %c0_5, %c0_6] : memref<1x1x8x2x8x8xf32, #tpu.memory_space<vmem>>, vector<1x1x8x1x8x8xf32>
    %4 = vector.shape_cast %3 : vector<1x1x8x1x8x8xf32> to vector<8x8x8xf32>
    %5 = vector.shape_cast %4 : vector<8x8x8xf32> to vector<64x8xf32>
    %cst_7 = arith.constant dense<0.000000e+00> : vector<64xf32>
    %6 = vector.multi_reduction <add>, %5, %cst_7 [1] : vector<64x8xf32> to vector<64xf32>
    %7 = vector.shape_cast %6 : vector<64xf32> to vector<64x1xf32>
    %8 = arith.addf %1, %7 : vector<64x1xf32>
    %9 = arith.mulf %5, %5 : vector<64x8xf32>
    %cst_8 = arith.constant dense<0.000000e+00> : vector<64xf32>
    %10 = vector.multi_reduction <add>, %9, %cst_8 [1] : vector<64x8xf32> to vector<64xf32>
    %11 = vector.shape_cast %10 : vector<64xf32> to vector<64x1xf32>
    %12 = arith.addf %2, %11 : vector<64x1xf32>
    %c0_9 = arith.constant 0 : index
    %c0_10 = arith.constant 0 : index
    %c0_11 = arith.constant 0 : index
    %13 = vector.load %arg3[%c0_9, %c0_10, %c0_11] : memref<2x8x8xf32, #tpu.memory_space<vmem>>, vector<1x8x8xf32>
    %14 = vector.shape_cast %13 : vector<1x8x8xf32> to vector<8x8xf32>
    %cst_12 = arith.constant dense<0.000000e+00> : vector<64x8xf32>
    %15 = tpu.matmul %5, %14, %cst_12 {dimension_numbers = #tpu.dot_dimension_numbers<[1], [0], [0], [1], [0, 0, 1, 1], [], []>} : vector<64x8xf32>, vector<8x8xf32>, vector<64x8xf32> -> vector<64x8xf32>
    %16 = arith.addf %0, %15 : vector<64x8xf32>
    %c0_13 = arith.constant 0 : index
    %c0_14 = arith.constant 0 : index
    %c0_15 = arith.constant 0 : index
    %c1 = arith.constant 1 : index
    %c0_16 = arith.constant 0 : index
    %c0_17 = arith.constant 0 : index
    %17 = vector.load %arg2[%c0_13, %c0_14, %c0_15, %c1, %c0_16, %c0_17] : memref<1x1x8x2x8x8xf32, #tpu.memory_space<vmem>>, vector<1x1x8x1x8x8xf32>
    %18 = vector.shape_cast %17 : vector<1x1x8x1x8x8xf32> to vector<8x8x8xf32>
    %19 = vector.shape_cast %18 : vector<8x8x8xf32> to vector<64x8xf32>
    %cst_18 = arith.constant dense<0.000000e+00> : vector<64xf32>
    %20 = vector.multi_reduction <add>, %19, %cst_18 [1] : vector<64x8xf32> to vector<64xf32>
    %21 = vector.shape_cast %20 : vector<64xf32> to vector<64x1xf32>
    %22 = arith.addf %8, %21 : vector<64x1xf32>
    %23 = arith.mulf %19, %19 : vector<64x8xf32>
    %cst_19 = arith.constant dense<0.000000e+00> : vector<64xf32>
    %24 = vector.multi_reduction <add>, %23, %cst_19 [1] : vector<64x8xf32> to vector<64xf32>
    %25 = vector.shape_cast %24 : vector<64xf32> to vector<64x1xf32>
    %26 = arith.addf %12, %25 : vector<64x1xf32>
    %c1_20 = arith.constant 1 : index
    %c0_21 = arith.constant 0 : index
    %c0_22 = arith.constant 0 : index
    %27 = vector.load %arg3[%c1_20, %c0_21, %c0_22] : memref<2x8x8xf32, #tpu.memory_space<vmem>>, vector<1x8x8xf32>
    %28 = vector.shape_cast %27 : vector<1x8x8xf32> to vector<8x8xf32>
    %cst_23 = arith.constant dense<0.000000e+00> : vector<64x8xf32>
    %29 = tpu.matmul %19, %28, %cst_23 {dimension_numbers = #tpu.dot_dimension_numbers<[1], [0], [0], [1], [0, 0, 1, 1], [], []>} : vector<64x8xf32>, vector<8x8xf32>, vector<64x8xf32> -> vector<64x8xf32>
    %30 = arith.addf %16, %29 : vector<64x8xf32>
    %cst_24 = arith.constant 6.250000e-02 : f32
    %31 = vector.broadcast %cst_24 : f32 to vector<64x1xf32>
    %32 = arith.mulf %22, %31 : vector<64x1xf32>
    %cst_25 = arith.constant 6.250000e-02 : f32
    %33 = vector.broadcast %cst_25 : f32 to vector<64x1xf32>
    %34 = arith.mulf %26, %33 : vector<64x1xf32>
    %35 = arith.mulf %32, %32 : vector<64x1xf32>
    %36 = arith.subf %34, %35 : vector<64x1xf32>
    %cst_26 = arith.constant 9.99999974E-6 : f32
    %37 = vector.broadcast %cst_26 : f32 to vector<64x1xf32>
    %38 = arith.addf %36, %37 : vector<64x1xf32>
    %39 = math.rsqrt %38 : vector<64x1xf32>
    %40 = vector.broadcast %39 : vector<64x1xf32> to vector<64x8xf32>
    %41 = arith.mulf %40, %30 : vector<64x8xf32>
    %42 = arith.mulf %39, %32 : vector<64x1xf32>
    %c0_27 = arith.constant 0 : index
    %c0_28 = arith.constant 0 : index
    %43 = vector.load %arg4[%c0_27, %c0_28] : memref<1x8xf32, #tpu.memory_space<vmem>>, vector<1x8xf32>
    %44 = vector.broadcast %42 : vector<64x1xf32> to vector<64x8xf32>
    %45 = vector.broadcast %43 : vector<1x8xf32> to vector<64x8xf32>
    %46 = arith.mulf %44, %45 : vector<64x8xf32>
    %47 = arith.subf %41, %46 : vector<64x8xf32>
    %c0_29 = arith.constant 0 : index
    %c0_30 = arith.constant 0 : index
    %48 = vector.load %arg5[%c0_29, %c0_30] : memref<1x8xf32, #tpu.memory_space<vmem>>, vector<1x8xf32>
    %49 = vector.broadcast %48 : vector<1x8xf32> to vector<64x8xf32>
    %50 = arith.addf %47, %49 : vector<64x8xf32>
    %c0_31 = arith.constant 0 : index
    %c0_32 = arith.constant 0 : index
    %c0_33 = arith.constant 0 : index
    %51 = vector.load %arg6[%c0_31, %c0_32, %c0_33] : memref<1x64x8xf32, #tpu.memory_space<vmem>>, vector<1x64x8xf32>
    %52 = vector.shape_cast %51 : vector<1x64x8xf32> to vector<64x8xf32>
    %53 = vector.shape_cast %50 : vector<64x8xf32> to vector<1x64x8xf32>
    tpu.vector_store %arg6[%c0_31, %c0_32, %c0_33], %53 {strides = array<i32>} : memref<1x64x8xf32, #tpu.memory_space<vmem>>, vector<1x64x8xf32>,
    return
  }
  func.func @transform_0(%arg0: i32, %arg1: i32) -> (i32, i32, i32, i32, i32, i32) {
    %c0_i32 = arith.constant 0 : i32
    %c0_i32_0 = arith.constant 0 : i32
    %c0_i32_1 = arith.constant 0 : i32
    %c0_i32_2 = arith.constant 0 : i32
    %c0_i32_3 = arith.constant 0 : i32
    return %arg0, %c0_i32, %arg1, %c0_i32_0, %c0_i32_1, %c0_i32_2 : i32, i32, i32, i32, i32, i32
  }
  func.func @transform_1(%arg0: i32, %arg1: i32) -> (i32, i32, i32) {
    %c0_i32 = arith.constant 0 : i32
    %c0_i32_0 = arith.constant 0 : i32
    %c0_i32_1 = arith.constant 0 : i32
    %c0_i32_2 = arith.constant 0 : i32
    return %c0_i32, %c0_i32_0, %c0_i32_1 : i32, i32, i32
  }
  func.func @transform_2(%arg0: i32, %arg1: i32) -> (i32, i32) {
    %c0_i32 = arith.constant 0 : i32
    %c0_i32_0 = arith.constant 0 : i32
    %c0_i32_1 = arith.constant 0 : i32
    return %c0_i32, %c0_i32_0 : i32, i32
  }
  func.func @transform_3(%arg0: i32, %arg1: i32) -> (i32, i32) {
    %c0_i32 = arith.constant 0 : i32
    %c0_i32_0 = arith.constant 0 : i32
    %c0_i32_1 = arith.constant 0 : i32
    return %c0_i32, %c0_i32_0 : i32, i32
  }
  func.func @transform_4(%arg0: i32, %arg1: i32) -> (i32, i32, i32) {
    %c0_i32 = arith.constant 0 : i32
    %c0_i32_0 = arith.constant 0 : i32
    return %arg0, %arg1, %c0_i32 : i32, i32, i32
  }
}

</mosaic_0001>

<llo_original>
// kernel: tpu_custom_call.1
$region0: #{tpu_custom_call.1}
  #allocation0 [shape = 'u32[]', space=smem, size = 0x4, offset = 0x4, fixed_abs, tag = 'smem constant byte address 0x4 - core index']
  #allocation1 [shape = 'u32[72,128]{1,0:T(1,128)}', space=vmem, size = 0x9000, scoped, tag = 'internal scratch']
  %s0 = inlined_call_operand.hbm [shape: f32[8,1,8,2,8,8], index: 0, kind: input, shape index: {}]
  %s1 = inlined_call_operand.hbm [shape: f32[2,8,8], index: 1, kind: input, shape index: {}]
  %s2 = inlined_call_operand.vmem [shape: f32[1,8], index: 2, kind: input, shape index: {}]
  %s3 = inlined_call_operand.vmem [shape: f32[1,8], index: 3, kind: input, shape index: {}]
  %s4 = inlined_call_operand.vmem [shape: f32[8,64,8], index: 4, kind: output, shape index: {}]
  %s5 = sld [smem:[#allocation0]]
  $region57: #{tpu_custom_call.1} parent=0
    _
  %s7 = ssub.s32 1, %s5
  %s8 = scalar_select 0, %s7, %s5
  $region1: #{tpu_custom_call.1} parent=0
    #allocation2 [shape = 'u8[131072]{0}', space=vmem, size = 0x20000, scoped, tag = 'input window, operand 0']
    #allocation3 [shape = 's32[2]{0}', space=sflag, size = 0x8, scoped, tag = 'scoped memory for tpu_custom_call.1']
    #allocation4 [shape = 'u8[8192]{0}', space=vmem, size = 0x2000, scoped, tag = 'input window, operand 1, single buffered']
    #allocation5 [shape = 's32[1]{0}', space=sflag, size = 0x4, scoped, tag = 'scoped memory for tpu_custom_call.1']
    %9 = vsyncpa [#allocation3], 0
    %s10 = scalar_lea.sflag [#allocation3], 1
    %11 = vsyncpa %s10, 0
    %12 = vsyncpa [#allocation5], 0
    loop: start=0, step=1, limit=10
    $region2: #{tpu_custom_call.1} parent=1 // loop_pre_header
      _
    $region3: #{tpu_custom_call.1} parent=1 // loop_header
      %s14 = sphi 0, %s18
      %p15 = scmp.ge.s32.totalorder %s14, 10
      %s21 = sphi 0, %s33
      %s22 = sphi 0, %s29
      %s23 = sphi 0, %s21
      %s24 = sphi 0, %s22
      %s25 = sphi 0, %s23
      %s26 = sphi 0, %s24
      %s38 = sphi 0, %s40
      %s41 = sphi 0, %s38
      %s42 = sphi 0, %s41
      %s58 = sphi 0, %s42
      %s62 = sphi 0, %s62
      %s64 = sphi 0, %s62
      %s65 = sphi 0, %s64
      %s79 = sphi 0, %s65
      %s83 = sphi 0, %s83
      %s85 = sphi 0, %s83
      %s86 = sphi 0, %s85
      %s100 = sphi 0, %s86
      %s104 = sphi 0, %s104
      %s106 = sphi 0, %s104
      %s107 = sphi 0, %s106
      %s121 = sphi 0, %s107
      %s129 = sphi 0, %s131
      %s132 = sphi 0, %s129
      %s133 = sphi 0, %s132
      %s149 = sphi 0, %s133
    $region4: #{tpu_custom_call.1} parent=1 // loop_header_branch
      %17 = sbr.rel (%p15) target = $region8
    $region5: #{tpu_custom_call.1} parent=1 // loop_body
      %s19 = ssub.s32 %s14, 1
      %s20 = ssub.s32 %s14, 2
      %s27 = sadd.s32 1, %s22
      %p28 = scmp.ge.s32.totalorder %s27, 1
      %s29 = scalar_select %p28, 0, %s27
      %s30 = sadd.s32 1, %s21
      %s31 = scalar_select %p28, %s30, %s21
      %p32 = scmp.ge.s32.totalorder %s31, 8
      %s33 = scalar_select %p32, 0, %s31
      %s34 = ssub.s32 %s21, %s33
      %s35 = ssub.s32 %s22, %s29
      %s36 = sor.u32 %s34, %s35
      %p37 = scmp.eq.s32.totalorder %s36, 0
      %s39 = sadd.s32 %s38, 1
      %s40 = scalar_select %p37, %s38, %s39
      %p43 = pneg %p37
      %p44 = scmp.eq.s32.totalorder %s14, 7
      %p45 = por %p43, %p44
      %p46 = scmp.ne.s32.totalorder %s38, %s41
      %p47 = scmp.eq.s32.totalorder %s14, 0
      %p48 = por %p46, %p47
      %p49 = scmp.ne.s32.totalorder %s38, %s41
      %p50 = scmp.eq.s32.totalorder %s19, 7
      %p51 = por %p49, %p50
      %p52 = scmp.ne.s32.totalorder %s41, %s42
      %p53 = scmp.eq.s32.totalorder %s19, 0
      %p54 = por %p52, %p53
      %p55 = scmp.ne.s32.totalorder %s41, %s42
      %p56 = scmp.eq.s32.totalorder %s20, 7
      %p57 = por %p55, %p56
      %p59 = scmp.ne.s32.totalorder %s42, %s58
      %p60 = scmp.eq.s32.totalorder %s20, 0
      %p61 = por %p59, %p60
      %s63 = sadd.s32 %s62, 1
      %p66 = scmp.eq.s32.totalorder %s14, 7
      %p67 = scmp.ne.s32.totalorder %s62, %s64
      %p68 = scmp.eq.s32.totalorder %s14, 0
      %p69 = por %p67, %p68
      %p70 = scmp.ne.s32.totalorder %s62, %s64
      %p71 = scmp.eq.s32.totalorder %s19, 7
      %p72 = por %p70, %p71
      %p73 = scmp.ne.s32.totalorder %s64, %s65
      %p74 = scmp.eq.s32.totalorder %s19, 0
      %p75 = por %p73, %p74
      %p76 = scmp.ne.s32.totalorder %s64, %s65
      %p77 = scmp.eq.s32.totalorder %s20, 7
      %p78 = por %p76, %p77
      %p80 = scmp.ne.s32.totalorder %s65, %s79
      %p81 = scmp.eq.s32.totalorder %s20, 0
      %p82 = por %p80, %p81
      %s84 = sadd.s32 %s83, 1
      %p87 = scmp.eq.s32.totalorder %s14, 7
      %p88 = scmp.ne.s32.totalorder %s83, %s85
      %p89 = scmp.eq.s32.totalorder %s14, 0
      %p90 = por %p88, %p89
      %p91 = scmp.ne.s32.totalorder %s83, %s85
      %p92 = scmp.eq.s32.totalorder %s19, 7
      %p93 = por %p91, %p92
      %p94 = scmp.ne.s32.totalorder %s85, %s86
      %p95 = scmp.eq.s32.totalorder %s19, 0
      %p96 = por %p94, %p95
      %p97 = scmp.ne.s32.totalorder %s85, %s86
      %p98 = scmp.eq.s32.totalorder %s20, 7
      %p99 = por %p97, %p98
      %p101 = scmp.ne.s32.totalorder %s86, %s100
      %p102 = scmp.eq.s32.totalorder %s20, 0
      %p103 = por %p101, %p102
      %s105 = sadd.s32 %s104, 1
      %p108 = scmp.eq.s32.totalorder %s14, 7
      %p109 = scmp.ne.s32.totalorder %s104, %s106
      %p110 = scmp.eq.s32.totalorder %s14, 0
      %p111 = por %p109, %p110
      %p112 = scmp.ne.s32.totalorder %s104, %s106
      %p113 = scmp.eq.s32.totalorder %s19, 7
      %p114 = por %p112, %p113
      %p115 = scmp.ne.s32.totalorder %s106, %s107
      %p116 = scmp.eq.s32.totalorder %s19, 0
      %p117 = por %p115, %p116
      %p118 = scmp.ne.s32.totalorder %s106, %s107
      %p119 = scmp.eq.s32.totalorder %s20, 7
      %p120 = por %p118, %p119
      %p122 = scmp.ne.s32.totalorder %s107, %s121
      %p123 = scmp.eq.s32.totalorder %s20, 0
      %p124 = por %p122, %p123
      %s125 = ssub.s32 %s21, %s33
      %s126 = ssub.s32 %s22, %s29
      %s127 = sor.u32 %s125, %s126
      %p128 = scmp.eq.s32.totalorder %s127, 0
      %s130 = sadd.s32 %s129, 1
      %s131 = scalar_select %p128, %s129, %s130
      %p134 = pneg %p128
      %p135 = scmp.eq.s32.totalorder %s14, 7
      %p136 = por %p134, %p135
      %p137 = scmp.ne.s32.totalorder %s129, %s132
      %p138 = scmp.eq.s32.totalorder %s14, 0
      %p139 = por %p137, %p138
      %p140 = scmp.ne.s32.totalorder %s129, %s132
      %p141 = scmp.eq.s32.totalorder %s19, 7
      %p142 = por %p140, %p141
      %p143 = scmp.ne.s32.totalorder %s132, %s133
      %p144 = scmp.eq.s32.totalorder %s19, 0
      %p145 = por %p143, %p144
      %p146 = scmp.ne.s32.totalorder %s132, %s133
      %p147 = scmp.eq.s32.totalorder %s20, 7
      %p148 = por %p146, %p147
      %p150 = scmp.ne.s32.totalorder %s133, %s149
      %p151 = scmp.eq.s32.totalorder %s20, 0
      %p152 = por %p150, %p151
      %p153 = scmp.le.s32.totalorder 1, %s14
      %p154 = scmp.lt.s32.totalorder %s14, 9
      %p155 = pnand %p153, %p154
      %p156 = pneg %p155
      // Predicated region
      $region9: #{tpu_custom_call.1} parent=5 // pred_check
        _
      $region10: #{tpu_custom_call.1} parent=5 // pred_check_branch
        %158 = sbr.rel (%p155) target = $region12
      $region11: #{tpu_custom_call.1} parent=5 // pred_region
        %s159 = ssub.s32 %s14, 1
        // Predicated region
        $region13: #{tpu_custom_call.1} parent=11 // pred_check
          %p160 = pneg %p75
        $region14: #{tpu_custom_call.1} parent=11 // pred_check_branch
          %162 = sbr.rel (%p160) target = $region16
        $region15: #{tpu_custom_call.1} parent=11 // pred_region
          %164 = vsyncadd [#allocation5], 0
          %s165 = sshll.u32 %s1, 4
          %s166 = int_to_ptr.hbm [resolvable:$true] %s165
          %s167 = sshll.u32 [#allocation4], 4
          %s168 = int_to_ptr.vmem [resolvable:$true] %s167
          %173 = dma.hbm_to_vmem [thread:$0]  %s166, 256, %s168, [#allocation5], 128, 128, 8
        $region16: #{tpu_custom_call.1} parent=11 // pred_fallthru
          _
        // Predicated region
        $region17: #{tpu_custom_call.1} parent=11 // pred_check
          %p174 = pneg %p96
        $region18: #{tpu_custom_call.1} parent=11 // pred_check_branch
          %176 = sbr.rel (%p174) target = $region20
        $region19: #{tpu_custom_call.1} parent=11 // pred_region
          _
        $region20: #{tpu_custom_call.1} parent=11 // pred_fallthru
          _
        // Predicated region
        $region21: #{tpu_custom_call.1} parent=11 // pred_check
          %p177 = pneg %p117
        $region22: #{tpu_custom_call.1} parent=11 // pred_check_branch
          %179 = sbr.rel (%p177) target = $region24
        $region23: #{tpu_custom_call.1} parent=11 // pred_region
          _
        $region24: #{tpu_custom_call.1} parent=11 // pred_fallthru
          _
      $region12: #{tpu_custom_call.1} parent=5 // pred_fallthru
        _
      %p180 = scmp.lt.s32.totalorder %s14, 8
      // Predicated region
      $region25: #{tpu_custom_call.1} parent=5 // pred_check
        %p181 = pneg %p180
      $region26: #{tpu_custom_call.1} parent=5 // pred_check_branch
        %183 = sbr.rel (%p181) target = $region28
      $region27: #{tpu_custom_call.1} parent=5 // pred_region
        // Predicated region
        $region29: #{tpu_custom_call.1} parent=27 // pred_check
          %p184 = pneg %p48
        $region30: #{tpu_custom_call.1} parent=27 // pred_check_branch
          %186 = sbr.rel (%p184) target = $region32
        $region31: #{tpu_custom_call.1} parent=27 // pred_region
          %s187 = sand.u32 %s38, 1
          %s188 = scalar_lea.sflag [#allocation3], %s187
          %s189 = sand.u32 %s38, 1
          %s190 = smul.addr %s189, 128
          %s191 = scalar_lea.vmem [#allocation2], %s190
          %s192 = smul.u32 8, %s22
          %194 = vsyncadd %s188, 0
          %s195 = smul.addr %s192, 2
          %s196 = smul.addr %s21, 16
          %s197 = sadd.s32 %s195, %s196
          %s198 = smul.addr %s197, 8
          %s199 = scalar_lea.hbm %s0, %s198
          %s200 = sshll.u32 %s199, 4
          %s201 = int_to_ptr.hbm [resolvable:$true] %s200
          %s202 = sshll.u32 %s191, 4
          %s203 = int_to_ptr.vmem [resolvable:$true] %s202
          %208 = dma.hbm_to_vmem [thread:$0]  %s201, 2048, %s203, %s188, 128, 128, 8
        $region32: #{tpu_custom_call.1} parent=27 // pred_fallthru
          _
      $region28: #{tpu_custom_call.1} parent=5 // pred_fallthru
        _
      %p209 = scmp.le.s32.totalorder 1, %s14
      %p210 = scmp.lt.s32.totalorder %s14, 9
      %p211 = pnand %p209, %p210
      %p212 = pneg %p211
      // Predicated region
      $region33: #{tpu_custom_call.1} parent=5 // pred_check
        _
      $region34: #{tpu_custom_call.1} parent=5 // pred_check_branch
        %214 = sbr.rel (%p211) target = $region36
      $region35: #{tpu_custom_call.1} parent=5 // pred_region
        %s215 = ssub.s32 %s14, 1
        %s216 = sand.u32 %s41, 1
        %s217 = scalar_lea.sflag [#allocation3], %s216
        %s218 = sand.u32 %s41, 1
        %s219 = smul.addr %s218, 128
        %s220 = scalar_lea.vmem [#allocation2], %s219
        // Predicated region
        $region37: #{tpu_custom_call.1} parent=35 // pred_check
          %p221 = pneg %p54
        $region38: #{tpu_custom_call.1} parent=35 // pred_check_branch
          %223 = sbr.rel (%p221) target = $region40
        $region39: #{tpu_custom_call.1} parent=35 // pred_region
          %225 = dma.done %s217, 2048
        $region40: #{tpu_custom_call.1} parent=35 // pred_fallthru
          _
        // Predicated region
        $region41: #{tpu_custom_call.1} parent=35 // pred_check
          %p226 = pneg %p75
        $region42: #{tpu_custom_call.1} parent=35 // pred_check_branch
          %228 = sbr.rel (%p226) target = $region44
        $region43: #{tpu_custom_call.1} parent=35 // pred_region
          %230 = dma.done [#allocation5], 256
        $region44: #{tpu_custom_call.1} parent=35 // pred_fallthru
          _
        %s231 = sand.u32 %s41, 1
        %s232 = scalar_lea.sflag [#allocation3], %s231
        %s233 = sand.u32 %s41, 1
        %s234 = smul.addr %s233, 128
        %s235 = scalar_lea.vmem [#allocation2], %s234
        %p236 = pneg %p54
        %p237 = pneg %p51
        %p238 = pneg %p75
        %p239 = pneg %p72
        %p240 = pneg %p96
        %p241 = pneg %p93
        %p242 = pneg %p117
        %p243 = pneg %p114
        %p244 = pneg %p145
        %p245 = pneg %p142
        %s246 = smul.u32 8, %s24
        %p247 = scmp.lt.s32.totalorder %s23, 7
        %s248 = scalar_select %p247, %s23, 7
        %p249 = scmp.lt.s32.totalorder %s246, 7
        %s250 = scalar_select %p249, %s246, 7
        %s251 = smul.addr %s248, 8
        %s252 = sadd.s32 %s250, %s251
        %s253 = smul.addr %s252, 8
        %s254 = scalar_lea.vmem %s4, %s253
        %s255 = smul.u32 8, %s24
        %s256 = smul.u32 8, %s24
        %p257 = scmp.lt.s32.totalorder %s23, 7
        %s258 = scalar_select %p257, %s23, 7
        %p259 = scmp.lt.s32.totalorder %s256, 7
        %s260 = scalar_select %p259, %s256, 7
        %s261 = smul.addr %s258, 8
        %s262 = sadd.s32 %s260, %s261
        %s263 = smul.addr %s262, 8
        %s264 = scalar_lea.vmem %s4, %s263
        %s265 = smul.u32 8, %s24
        %v266 = vld [vmem:[%s220] sm:$0xff]
        %v267 = vld [vmem:[%s220 + $0x10] sm:$0xff]
        %v268 = vld [vmem:[%s220 + $0x20] sm:$0xff]
        %v269 = vld [vmem:[%s220 + $0x30] sm:$0xff]
        %v270 = vld [vmem:[%s220 + $0x40] sm:$0xff]
        %v271 = vld [vmem:[%s220 + $0x50] sm:$0xff]
        %v272 = vld [vmem:[%s220 + $0x60] sm:$0xff]
        %v273 = vld [vmem:[%s220 + $0x70] sm:$0xff]
        %vm274 = vcmask 64512
        %v275 = vsel %vm274, %v266, 0.0
        %276 = vadd.xlane.f32.xlu0 %v275
        %v277 = vpop.xlane.xlu0 %276
        %v278 = vsel %vm274, %v267, 0.0
        %279 = vadd.xlane.f32.xlu0 %v278
        %v280 = vpop.xlane.xlu0 %279
        %v281 = vsel %vm274, %v268, 0.0
        %282 = vadd.xlane.f32.xlu0 %v281
        %v283 = vpop.xlane.xlu0 %282
        %v284 = vsel %vm274, %v269, 0.0
        %285 = vadd.xlane.f32.xlu0 %v284
        %v286 = vpop.xlane.xlu0 %285
        %v287 = vsel %vm274, %v270, 0.0
        %288 = vadd.xlane.f32.xlu0 %v287
        %v289 = vpop.xlane.xlu0 %288
        %v290 = vsel %vm274, %v271, 0.0
        %291 = vadd.xlane.f32.xlu0 %v290
        %v292 = vpop.xlane.xlu0 %291
        %v293 = vsel %vm274, %v272, 0.0
        %294 = vadd.xlane.f32.xlu0 %v293
        %v295 = vpop.xlane.xlu0 %294
        %v296 = vsel %vm274, %v273, 0.0
        %297 = vadd.xlane.f32.xlu0 %v296
        %v298 = vpop.xlane.xlu0 %297
        %v299 = vadd.f32 %v277, 0.0
        %v300 = vadd.f32 %v280, 0.0
        %v301 = vadd.f32 %v283, 0.0
        %v302 = vadd.f32 %v286, 0.0
        %v303 = vadd.f32 %v289, 0.0
        %v304 = vadd.f32 %v292, 0.0
        %v305 = vadd.f32 %v295, 0.0
        %v306 = vadd.f32 %v298, 0.0
        %v307 = vmul.f32 %v266, %v266
        %v308 = vmul.f32 %v267, %v267
        %v309 = vmul.f32 %v268, %v268
        %v310 = vmul.f32 %v269, %v269
        %v311 = vmul.f32 %v270, %v270
        %v312 = vmul.f32 %v271, %v271
        %v313 = vmul.f32 %v272, %v272
        %v314 = vmul.f32 %v273, %v273
        %v315 = vsel %vm274, %v307, 0.0
        %316 = vadd.xlane.f32.xlu0 %v315
        %v317 = vpop.xlane.xlu0 %316
        %v318 = vsel %vm274, %v308, 0.0
        %319 = vadd.xlane.f32.xlu0 %v318
        %v320 = vpop.xlane.xlu0 %319
        %v321 = vsel %vm274, %v309, 0.0
        %322 = vadd.xlane.f32.xlu0 %v321
        %v323 = vpop.xlane.xlu0 %322
        %v324 = vsel %vm274, %v310, 0.0
        %325 = vadd.xlane.f32.xlu0 %v324
        %v326 = vpop.xlane.xlu0 %325
        %v327 = vsel %vm274, %v311, 0.0
        %328 = vadd.xlane.f32.xlu0 %v327
        %v329 = vpop.xlane.xlu0 %328
        %v330 = vsel %vm274, %v312, 0.0
        %331 = vadd.xlane.f32.xlu0 %v330
        %v332 = vpop.xlane.xlu0 %331
        %v333 = vsel %vm274, %v313, 0.0
        %334 = vadd.xlane.f32.xlu0 %v333
        %v335 = vpop.xlane.xlu0 %334
        %v336 = vsel %vm274, %v314, 0.0
        %337 = vadd.xlane.f32.xlu0 %v336
        %v338 = vpop.xlane.xlu0 %337
        %v339 = vadd.f32 %v317, 0.0
        %v340 = vadd.f32 %v320, 0.0
        %v341 = vadd.f32 %v323, 0.0
        %v342 = vadd.f32 %v326, 0.0
        %v343 = vadd.f32 %v329, 0.0
        %v344 = vadd.f32 %v332, 0.0
        %v345 = vadd.f32 %v335, 0.0
        %v346 = vadd.f32 %v338, 0.0
        %v347 = vld [vmem:[#allocation4] sm:$0xff]
        %s348 = scalar_lea.vmem %s220, 8 [#allocation2]
        %v349 = vld [vmem:[%s348] sm:$0xff]
        %v350 = vld [vmem:[%s348 + $0x10] sm:$0xff]
        %v351 = vld [vmem:[%s348 + $0x20] sm:$0xff]
        %v352 = vld [vmem:[%s348 + $0x30] sm:$0xff]
        %v353 = vld [vmem:[%s348 + $0x40] sm:$0xff]
        %v354 = vld [vmem:[%s348 + $0x50] sm:$0xff]
        %v355 = vld [vmem:[%s348 + $0x60] sm:$0xff]
        %v356 = vld [vmem:[%s348 + $0x70] sm:$0xff]
        %v357 = vsel %vm274, %v349, 0.0
        %358 = vadd.xlane.f32.xlu0 %v357
        %v359 = vpop.xlane.xlu0 %358
        %v360 = vsel %vm274, %v350, 0.0
        %361 = vadd.xlane.f32.xlu0 %v360
        %v362 = vpop.xlane.xlu0 %361
        %v363 = vsel %vm274, %v351, 0.0
        %364 = vadd.xlane.f32.xlu0 %v363
        %v365 = vpop.xlane.xlu0 %364
        %v366 = vsel %vm274, %v352, 0.0
        %367 = vadd.xlane.f32.xlu0 %v366
        %v368 = vpop.xlane.xlu0 %367
        %v369 = vsel %vm274, %v353, 0.0
        %370 = vadd.xlane.f32.xlu0 %v369
        %v371 = vpop.xlane.xlu0 %370
        %v372 = vsel %vm274, %v354, 0.0
        %373 = vadd.xlane.f32.xlu0 %v372
        %v374 = vpop.xlane.xlu0 %373
        %v375 = vsel %vm274, %v355, 0.0
        %376 = vadd.xlane.f32.xlu0 %v375
        %v377 = vpop.xlane.xlu0 %376
        %v378 = vsel %vm274, %v356, 0.0
        %379 = vadd.xlane.f32.xlu0 %v378
        %v380 = vpop.xlane.xlu0 %379
        %v381 = vadd.f32 %v299, %v359
        %v382 = vadd.f32 %v300, %v362
        %v383 = vadd.f32 %v301, %v365
        %v384 = vadd.f32 %v302, %v368
        %v385 = vadd.f32 %v303, %v371
        %v386 = vadd.f32 %v304, %v374
        %v387 = vadd.f32 %v305, %v377
        %v388 = vadd.f32 %v306, %v380
        %v389 = vmul.f32 %v349, %v349
        %v390 = vmul.f32 %v350, %v350
        %v391 = vmul.f32 %v351, %v351
        %v392 = vmul.f32 %v352, %v352
        %v393 = vmul.f32 %v353, %v353
        %v394 = vmul.f32 %v354, %v354
        %v395 = vmul.f32 %v355, %v355
        %v396 = vmul.f32 %v356, %v356
        %v397 = vsel %vm274, %v389, 0.0
        %398 = vadd.xlane.f32.xlu0 %v397
        %v399 = vpop.xlane.xlu0 %398
        %v400 = vsel %vm274, %v390, 0.0
        %401 = vadd.xlane.f32.xlu0 %v400
        %v402 = vpop.xlane.xlu0 %401
        %v403 = vsel %vm274, %v391, 0.0
        %404 = vadd.xlane.f32.xlu0 %v403
        %v405 = vpop.xlane.xlu0 %404
        %v406 = vsel %vm274, %v392, 0.0
        %407 = vadd.xlane.f32.xlu0 %v406
        %v408 = vpop.xlane.xlu0 %407
        %v409 = vsel %vm274, %v393, 0.0
        %410 = vadd.xlane.f32.xlu0 %v409
        %v411 = vpop.xlane.xlu0 %410
        %v412 = vsel %vm274, %v394, 0.0
        %413 = vadd.xlane.f32.xlu0 %v412
        %v414 = vpop.xlane.xlu0 %413
        %v415 = vsel %vm274, %v395, 0.0
        %416 = vadd.xlane.f32.xlu0 %v415
        %v417 = vpop.xlane.xlu0 %416
        %v418 = vsel %vm274, %v396, 0.0
        %419 = vadd.xlane.f32.xlu0 %v418
        %v420 = vpop.xlane.xlu0 %419
        %v421 = vadd.f32 %v339, %v399
        %v422 = vadd.f32 %v340, %v402
        %v423 = vadd.f32 %v341, %v405
        %v424 = vadd.f32 %v342, %v408
        %v425 = vadd.f32 %v343, %v411
        %v426 = vadd.f32 %v344, %v414
        %v427 = vadd.f32 %v345, %v417
        %v428 = vadd.f32 %v346, %v420
        %s429 = scalar_lea.vmem [#allocation4], 8
        %v430 = vld [vmem:[%s429] sm:$0xff]
        %v432 = vsel %vm274, %v349, 0
        %v435 = vsel %vm274, %v350, 0
        %v438 = vsel %vm274, %v351, 0
        %v441 = vsel %vm274, %v352, 0
        %v444 = vsel %vm274, %v353, 0
        %v447 = vsel %vm274, %v354, 0
        %v450 = vsel %vm274, %v355, 0
        %v453 = vsel %vm274, %v356, 0
        %455 = vmatpush.msra.mxu0 0.0
        %456 = vmatpush.msra.mxu0 0.0
        %457 = vmatpush.msra.mxu0 0.0
        %458 = vmatpush.msra.mxu0 0.0
        %459 = vmatpush.msra.mxu0 0.0
        %460 = vmatpush.msra.mxu0 0.0
        %461 = vmatpush.msra.mxu0 0.0
        %462 = vmatpush.msra.mxu0 0.0
        %463 = vmatpush.msra.mxu0 0.0
        %464 = vmatpush.msra.mxu0 0.0
        %465 = vmatpush.msra.mxu0 0.0
        %466 = vmatpush.msra.mxu0 0.0
        %467 = vmatpush.msra.mxu0 0.0
        %468 = vmatpush.msra.mxu0 0.0
        %469 = vmatpush.msra.mxu0 0.0
        %470 = vmatpush.msra.mxu0 %v430
        %471 = vmatmul.f32.gmra.mxu0 %v432
        %v472 = vpop.f32.mrf.mxu0
        %v473 = vadd.f32 0.0, %v472
        %474 = vmatmul.f32.gmra.mxu0 %v435
        %v475 = vpop.f32.mrf.mxu0
        %v476 = vadd.f32 0.0, %v475
        %477 = vmatmul.f32.gmra.mxu0 %v438
        %v478 = vpop.f32.mrf.mxu0
        %v479 = vadd.f32 0.0, %v478
        %480 = vmatmul.f32.gmra.mxu0 %v441
        %v481 = vpop.f32.mrf.mxu0
        %v482 = vadd.f32 0.0, %v481
        %483 = vmatmul.f32.gmra.mxu0 %v444
        %v484 = vpop.f32.mrf.mxu0
        %v485 = vadd.f32 0.0, %v484
        %486 = vmatmul.f32.gmra.mxu0 %v447
        %v487 = vpop.f32.mrf.mxu0
        %v488 = vadd.f32 0.0, %v487
        %489 = vmatmul.f32.gmra.mxu0 %v450
        %v490 = vpop.f32.mrf.mxu0
        %v491 = vadd.f32 0.0, %v490
        %492 = vmatmul.f32.gmra.mxu0 %v453
        %v493 = vpop.f32.mrf.mxu0
        %v494 = vadd.f32 0.0, %v493
        %495 = vdwg.mxu0
        %v497 = vsel %vm274, %v266, 0
        %v500 = vsel %vm274, %v267, 0
        %v503 = vsel %vm274, %v268, 0
        %v506 = vsel %vm274, %v269, 0
        %v509 = vsel %vm274, %v270, 0
        %v512 = vsel %vm274, %v271, 0
        %v515 = vsel %vm274, %v272, 0
        %v518 = vsel %vm274, %v273, 0
        %520 = vmatpush.msra.mxu0 0.0
        %521 = vmatpush.msra.mxu0 0.0
        %522 = vmatpush.msra.mxu0 0.0
        %523 = vmatpush.msra.mxu0 0.0
        %524 = vmatpush.msra.mxu0 0.0
        %525 = vmatpush.msra.mxu0 0.0
        %526 = vmatpush.msra.mxu0 0.0
        %527 = vmatpush.msra.mxu0 0.0
        %528 = vmatpush.msra.mxu0 0.0
        %529 = vmatpush.msra.mxu0 0.0
        %530 = vmatpush.msra.mxu0 0.0
        %531 = vmatpush.msra.mxu0 0.0
        %532 = vmatpush.msra.mxu0 0.0
        %533 = vmatpush.msra.mxu0 0.0
        %534 = vmatpush.msra.mxu0 0.0
        %535 = vmatpush.msra.mxu0 %v347
        %536 = vmatmul.f32.gmra.mxu0 %v497
        %v537 = vpop.f32.mrf.mxu0
        %v538 = vadd.f32 %v473, %v537
        %539 = vmatmul.f32.gmra.mxu0 %v500
        %v540 = vpop.f32.mrf.mxu0
        %v541 = vadd.f32 %v476, %v540
        %542 = vmatmul.f32.gmra.mxu0 %v503
        %v543 = vpop.f32.mrf.mxu0
        %v544 = vadd.f32 %v479, %v543
        %545 = vmatmul.f32.gmra.mxu0 %v506
        %v546 = vpop.f32.mrf.mxu0
        %v547 = vadd.f32 %v482, %v546
        %548 = vmatmul.f32.gmra.mxu0 %v509
        %v549 = vpop.f32.mrf.mxu0
        %v550 = vadd.f32 %v485, %v549
        %551 = vmatmul.f32.gmra.mxu0 %v512
        %v552 = vpop.f32.mrf.mxu0
        %v553 = vadd.f32 %v488, %v552
        %554 = vmatmul.f32.gmra.mxu0 %v515
        %v555 = vpop.f32.mrf.mxu0
        %v556 = vadd.f32 %v491, %v555
        %557 = vmatmul.f32.gmra.mxu0 %v518
        %v558 = vpop.f32.mrf.mxu0
        %v559 = vadd.f32 %v494, %v558
        %560 = vdwg.mxu0
        %v561 = vmul.f32 %v381, 0.0625
        %v562 = vmul.f32 %v382, 0.0625
        %v563 = vmul.f32 %v383, 0.0625
        %v564 = vmul.f32 %v384, 0.0625
        %v565 = vmul.f32 %v385, 0.0625
        %v566 = vmul.f32 %v386, 0.0625
        %v567 = vmul.f32 %v387, 0.0625
        %v568 = vmul.f32 %v388, 0.0625
        %v569 = vmul.f32 %v421, 0.0625
        %v570 = vmul.f32 %v422, 0.0625
        %v571 = vmul.f32 %v423, 0.0625
        %v572 = vmul.f32 %v424, 0.0625
        %v573 = vmul.f32 %v425, 0.0625
        %v574 = vmul.f32 %v426, 0.0625
        %v575 = vmul.f32 %v427, 0.0625
        %v576 = vmul.f32 %v428, 0.0625
        %v577 = vmul.f32 %v561, %v561
        %v578 = vmul.f32 %v562, %v562
        %v579 = vmul.f32 %v563, %v563
        %v580 = vmul.f32 %v564, %v564
        %v581 = vmul.f32 %v565, %v565
        %v582 = vmul.f32 %v566, %v566
        %v583 = vmul.f32 %v567, %v567
        %v584 = vmul.f32 %v568, %v568
        %v585 = vsub.f32 %v569, %v577
        %v586 = vsub.f32 %v570, %v578
        %v587 = vsub.f32 %v571, %v579
        %v588 = vsub.f32 %v572, %v580
        %v589 = vsub.f32 %v573, %v581
        %v590 = vsub.f32 %v574, %v582
        %v591 = vsub.f32 %v575, %v583
        %v592 = vsub.f32 %v576, %v584
        %v593 = vadd.f32 %v585, 1e-05
        %v594 = vadd.f32 %v586, 1e-05
        %v595 = vadd.f32 %v587, 1e-05
        %v596 = vadd.f32 %v588, 1e-05
        %v597 = vadd.f32 %v589, 1e-05
        %v598 = vadd.f32 %v590, 1e-05
        %v599 = vadd.f32 %v591, 1e-05
        %v600 = vadd.f32 %v592, 1e-05
        %v601 = vrsqrt.pop %v593
        %v602 = vmul.f32 %v601, %v593
        %v603 = vmul.f32 %v602, %v601
        %v604 = vmul.f32 0.5, %v603
        %v605 = vsub.f32 1.5, %v604
        %v606 = vmul.f32 %v601, %v605
        %vm607 = vweird.f32 %v593
        %vm608 = vweird.f32 %v601
        %vm609 = vmor %vm607, %vm608
        %v610 = vsel %vm609, %v601, %v606
        %v611 = vrsqrt.pop %v594
        %v612 = vmul.f32 %v611, %v594
        %v613 = vmul.f32 %v612, %v611
        %v614 = vmul.f32 0.5, %v613
        %v615 = vsub.f32 1.5, %v614
        %v616 = vmul.f32 %v611, %v615
        %vm617 = vweird.f32 %v594
        %vm618 = vweird.f32 %v611
        %vm619 = vmor %vm617, %vm618
        %v620 = vsel %vm619, %v611, %v616
        %v621 = vrsqrt.pop %v595
        %v622 = vmul.f32 %v621, %v595
        %v623 = vmul.f32 %v622, %v621
        %v624 = vmul.f32 0.5, %v623
        %v625 = vsub.f32 1.5, %v624
        %v626 = vmul.f32 %v621, %v625
        %vm627 = vweird.f32 %v595
        %vm628 = vweird.f32 %v621
        %vm629 = vmor %vm627, %vm628
        %v630 = vsel %vm629, %v621, %v626
        %v631 = vrsqrt.pop %v596
        %v632 = vmul.f32 %v631, %v596
        %v633 = vmul.f32 %v632, %v631
        %v634 = vmul.f32 0.5, %v633
        %v635 = vsub.f32 1.5, %v634
        %v636 = vmul.f32 %v631, %v635
        %vm637 = vweird.f32 %v596
        %vm638 = vweird.f32 %v631
        %vm639 = vmor %vm637, %vm638
        %v640 = vsel %vm639, %v631, %v636
        %v641 = vrsqrt.pop %v597
        %v642 = vmul.f32 %v641, %v597
        %v643 = vmul.f32 %v642, %v641
        %v644 = vmul.f32 0.5, %v643
        %v645 = vsub.f32 1.5, %v644
        %v646 = vmul.f32 %v641, %v645
        %vm647 = vweird.f32 %v597
        %vm648 = vweird.f32 %v641
        %vm649 = vmor %vm647, %vm648
        %v650 = vsel %vm649, %v641, %v646
        %v651 = vrsqrt.pop %v598
        %v652 = vmul.f32 %v651, %v598
        %v653 = vmul.f32 %v652, %v651
        %v654 = vmul.f32 0.5, %v653
        %v655 = vsub.f32 1.5, %v654
        %v656 = vmul.f32 %v651, %v655
        %vm657 = vweird.f32 %v598
        %vm658 = vweird.f32 %v651
        %vm659 = vmor %vm657, %vm658
        %v660 = vsel %vm659, %v651, %v656
        %v661 = vrsqrt.pop %v599
        %v662 = vmul.f32 %v661, %v599
        %v663 = vmul.f32 %v662, %v661
        %v664 = vmul.f32 0.5, %v663
        %v665 = vsub.f32 1.5, %v664
        %v666 = vmul.f32 %v661, %v665
        %vm667 = vweird.f32 %v599
        %vm668 = vweird.f32 %v661
        %vm669 = vmor %vm667, %vm668
        %v670 = vsel %vm669, %v661, %v666
        %v671 = vrsqrt.pop %v600
        %v672 = vmul.f32 %v671, %v600
        %v673 = vmul.f32 %v672, %v671
        %v674 = vmul.f32 0.5, %v673
        %v675 = vsub.f32 1.5, %v674
        %v676 = vmul.f32 %v671, %v675
        %vm677 = vweird.f32 %v600
        %vm678 = vweird.f32 %v671
        %vm679 = vmor %vm677, %vm678
        %v680 = vsel %vm679, %v671, %v676
        %v681 = vmul.f32 %v610, %v538
        %v682 = vmul.f32 %v620, %v541
        %v683 = vmul.f32 %v630, %v544
        %v684 = vmul.f32 %v640, %v547
        %v685 = vmul.f32 %v650, %v550
        %v686 = vmul.f32 %v660, %v553
        %v687 = vmul.f32 %v670, %v556
        %v688 = vmul.f32 %v680, %v559
        %v689 = vmul.f32 %v610, %v561
        %v690 = vmul.f32 %v620, %v562
        %v691 = vmul.f32 %v630, %v563
        %v692 = vmul.f32 %v640, %v564
        %v693 = vmul.f32 %v650, %v565
        %v694 = vmul.f32 %v660, %v566
        %v695 = vmul.f32 %v670, %v567
        %v696 = vmul.f32 %v680, %v568
        %v697 = vld [vmem:[%s2] sm:$0x1]
        %v699 = vperm.slane %v697, 0
        %v701 = vmul.f32 %v689, %v699
        %v702 = vmul.f32 %v690, %v699
        %v703 = vmul.f32 %v691, %v699
        %v704 = vmul.f32 %v692, %v699
        %v705 = vmul.f32 %v693, %v699
        %v706 = vmul.f32 %v694, %v699
        %v707 = vmul.f32 %v695, %v699
        %v708 = vmul.f32 %v696, %v699
        %v709 = vsub.f32 %v681, %v701
        %v710 = vsub.f32 %v682, %v702
        %v711 = vsub.f32 %v683, %v703
        %v712 = vsub.f32 %v684, %v704
        %v713 = vsub.f32 %v685, %v705
        %v714 = vsub.f32 %v686, %v706
        %v715 = vsub.f32 %v687, %v707
        %v716 = vsub.f32 %v688, %v708
        %v717 = vld [vmem:[%s3] sm:$0x1]
        %v719 = vperm.slane %v717, 0
        %v721 = vadd.f32 %v709, %v719
        %v722 = vadd.f32 %v710, %v719
        %v723 = vadd.f32 %v711, %v719
        %v724 = vadd.f32 %v712, %v719
        %v725 = vadd.f32 %v713, %v719
        %v726 = vadd.f32 %v714, %v719
        %v727 = vadd.f32 %v715, %v719
        %v728 = vadd.f32 %v716, %v719
        %729 = vst.msk [vmem:[%s264] sm:$0xff] %vm274, %v721
        %730 = vst.msk [vmem:[%s264 + $0x8] sm:$0xff] %vm274, %v722
        %731 = vst.msk [vmem:[%s264 + $0x10] sm:$0xff] %vm274, %v723
        %732 = vst.msk [vmem:[%s264 + $0x18] sm:$0xff] %vm274, %v724
        %733 = vst.msk [vmem:[%s264 + $0x20] sm:$0xff] %vm274, %v725
        %734 = vst.msk [vmem:[%s264 + $0x28] sm:$0xff] %vm274, %v726
        %735 = vst.msk [vmem:[%s264 + $0x30] sm:$0xff] %vm274, %v727
        %736 = vst.msk [vmem:[%s264 + $0x38] sm:$0xff] %vm274, %v728
        %s737 = smul.u32 8, %s24
        %p738 = scmp.lt.s32.totalorder %s23, 7
        %s739 = scalar_select %p738, %s23, 7
        %p740 = scmp.lt.s32.totalorder %s737, 7
        %s741 = scalar_select %p740, %s737, 7
        %s742 = smul.addr %s739, 8
        %s743 = sadd.s32 %s741, %s742
        %s744 = smul.addr %s743, 8
        %s745 = scalar_lea.vmem %s4, %s744
        // Predicated region
        $region45: #{tpu_custom_call.1} parent=35 // pred_check
          %p746 = pneg %p142
        $region46: #{tpu_custom_call.1} parent=35 // pred_check_branch
          %748 = sbr.rel (%p746) target = $region48
        $region47: #{tpu_custom_call.1} parent=35 // pred_region
          %s749 = smul.u32 8, %s24
        $region48: #{tpu_custom_call.1} parent=35 // pred_fallthru
          _
      $region36: #{tpu_custom_call.1} parent=5 // pred_fallthru
        _
      %p750 = scmp.le.s32.totalorder 2, %s14
      // Predicated region
      $region49: #{tpu_custom_call.1} parent=5 // pred_check
        %p751 = pneg %p750
      $region50: #{tpu_custom_call.1} parent=5 // pred_check_branch
        %753 = sbr.rel (%p751) target = $region52
      $region51: #{tpu_custom_call.1} parent=5 // pred_region
        %s754 = ssub.s32 %s14, 2
        // Predicated region
        $region53: #{tpu_custom_call.1} parent=51 // pred_check
          %p755 = pneg %p148
        $region54: #{tpu_custom_call.1} parent=51 // pred_check_branch
          %757 = sbr.rel (%p755) target = $region56
        $region55: #{tpu_custom_call.1} parent=51 // pred_region
          %s758 = smul.u32 8, %s26
          %p759 = scmp.lt.s32.totalorder %s25, 7
          %s760 = scalar_select %p759, %s25, 7
          %p761 = scmp.lt.s32.totalorder %s758, 7
          %s762 = scalar_select %p761, %s758, 7
          %s763 = smul.addr %s760, 8
          %s764 = sadd.s32 %s762, %s763
          %s765 = smul.addr %s764, 8
          %s766 = scalar_lea.vmem %s4, %s765
        $region56: #{tpu_custom_call.1} parent=51 // pred_fallthru
          _
      $region52: #{tpu_custom_call.1} parent=5 // pred_fallthru
        _
    $region6: #{tpu_custom_call.1} parent=1 // loop_footer
      %s18 = sadd.s32 1, %s14
    $region7: #{tpu_custom_call.1} parent=1 // loop_footer_branch
      %13 = sbr.rel target = $region3
    $region8: #{tpu_custom_call.1} parent=1 // loop_exit
      _
    %767 = vsyncpa [#allocation3], 1
    %s768 = scalar_lea.sflag [#allocation3], 1
    %769 = vsyncpa %s768, 1
    %770 = vsyncpa [#allocation5], 1

// kernel: tpu_custom_call.1
$region0: #{tpu_custom_call.1}
  #allocation0 [shape = 'u32[]', space=smem, size = 0x4, offset = 0x4, fixed_abs, tag = 'smem constant byte address 0x4 - core index']
  #allocation1 [shape = 'u32[72,128]{1,0:T(1,128)}', space=vmem, size = 0x9000, scoped, tag = 'internal scratch']
  %s0 = inlined_call_operand.hbm [shape: f32[8,1,8,2,8,8], index: 0, kind: input, shape index: {}]
  %s1 = inlined_call_operand.hbm [shape: f32[2,8,8], index: 1, kind: input, shape index: {}]
  %s2 = inlined_call_operand.vmem [shape: f32[1,8], index: 2, kind: input, shape index: {}]
  %s3 = inlined_call_operand.vmem [shape: f32[1,8], index: 3, kind: input, shape index: {}]
  %s4 = inlined_call_operand.vmem [shape: f32[8,64,8], index: 4, kind: output, shape index: {}]
  %s5 = sld [smem:[#allocation0]]
  $region57: #{tpu_custom_call.1} parent=0
    _
  %s7 = ssub.s32 1, %s5
  %s8 = scalar_select 0, %s7, %s5
  $region1: #{tpu_custom_call.1} parent=0
    #allocation2 [shape = 'u8[131072]{0}', space=vmem, size = 0x20000, scoped, tag = 'input window, operand 0']
    #allocation3 [shape = 's32[2]{0}', space=sflag, size = 0x8, scoped, tag = 'scoped memory for tpu_custom_call.1']
    #allocation4 [shape = 'u8[8192]{0}', space=vmem, size = 0x2000, scoped, tag = 'input window, operand 1, single buffered']
    #allocation5 [shape = 's32[1]{0}', space=sflag, size = 0x4, scoped, tag = 'scoped memory for tpu_custom_call.1']
    %9 = vsyncpa [#allocation3], 0
    %s10 = scalar_lea.sflag [#allocation3], 1
    %11 = vsyncpa %s10, 0
    %12 = vsyncpa [#allocation5], 0
    loop: start=0, step=1, limit=10
    $region2: #{tpu_custom_call.1} parent=1 // loop_pre_header
      _
    $region3: #{tpu_custom_call.1} parent=1 // loop_header
      %s14 = sphi 0, %s18
      %p15 = scmp.ge.s32.totalorder %s14, 10
      %s21 = sphi 0, %s33
      %s22 = sphi 0, %s29
      %s23 = sphi 0, %s21
      %s24 = sphi 0, %s22
      %s25 = sphi 0, %s23
      %s26 = sphi 0, %s24
      %s38 = sphi 0, %s40
      %s41 = sphi 0, %s38
      %s42 = sphi 0, %s41
      %s58 = sphi 0, %s42
      %s62 = sphi 0, %s62
      %s64 = sphi 0, %s62
      %s65 = sphi 0, %s64
      %s79 = sphi 0, %s65
      %s83 = sphi 0, %s83
      %s85 = sphi 0, %s83
      %s86 = sphi 0, %s85
      %s100 = sphi 0, %s86
      %s104 = sphi 0, %s104
      %s106 = sphi 0, %s104
      %s107 = sphi 0, %s106
      %s121 = sphi 0, %s107
      %s129 = sphi 0, %s131
      %s132 = sphi 0, %s129
      %s133 = sphi 0, %s132
      %s149 = sphi 0, %s133
    $region4: #{tpu_custom_call.1} parent=1 // loop_header_branch
      %17 = sbr.rel (%p15) target = $region8
    $region5: #{tpu_custom_call.1} parent=1 // loop_body
      %s19 = ssub.s32 %s14, 1
      %s20 = ssub.s32 %s14, 2
      %s27 = sadd.s32 1, %s22
      %p28 = scmp.ge.s32.totalorder %s27, 1
      %s29 = scalar_select %p28, 0, %s27
      %s30 = sadd.s32 1, %s21
      %s31 = scalar_select %p28, %s30, %s21
      %p32 = scmp.ge.s32.totalorder %s31, 8
      %s33 = scalar_select %p32, 0, %s31
      %s34 = ssub.s32 %s21, %s33
      %s35 = ssub.s32 %s22, %s29
      %s36 = sor.u32 %s34, %s35
      %p37 = scmp.eq.s32.totalorder %s36, 0
      %s39 = sadd.s32 %s38, 1
      %s40 = scalar_select %p37, %s38, %s39
      %p43 = pneg %p37
      %p44 = scmp.eq.s32.totalorder %s14, 7
      %p45 = por %p43, %p44
      %p46 = scmp.ne.s32.totalorder %s38, %s41
      %p47 = scmp.eq.s32.totalorder %s14, 0
      %p48 = por %p46, %p47
      %p49 = scmp.ne.s32.totalorder %s38, %s41
      %p50 = scmp.eq.s32.totalorder %s19, 7
      %p51 = por %p49, %p50
      %p52 = scmp.ne.s32.totalorder %s41, %s42
      %p53 = scmp.eq.s32.totalorder %s19, 0
      %p54 = por %p52, %p53
      %p55 = scmp.ne.s32.totalorder %s41, %s42
      %p56 = scmp.eq.s32.totalorder %s20, 7
      %p57 = por %p55, %p56
      %p59 = scmp.ne.s32.totalorder %s42, %s58
      %p60 = scmp.eq.s32.totalorder %s20, 0
      %p61 = por %p59, %p60
      %s63 = sadd.s32 %s62, 1
      %p66 = scmp.eq.s32.totalorder %s14, 7
      %p67 = scmp.ne.s32.totalorder %s62, %s64
      %p68 = scmp.eq.s32.totalorder %s14, 0
      %p69 = por %p67, %p68
      %p70 = scmp.ne.s32.totalorder %s62, %s64
      %p71 = scmp.eq.s32.totalorder %s19, 7
      %p72 = por %p70, %p71
      %p73 = scmp.ne.s32.totalorder %s64, %s65
      %p74 = scmp.eq.s32.totalorder %s19, 0
      %p75 = por %p73, %p74
      %p76 = scmp.ne.s32.totalorder %s64, %s65
      %p77 = scmp.eq.s32.totalorder %s20, 7
      %p78 = por %p76, %p77
      %p80 = scmp.ne.s32.totalorder %s65, %s79
      %p81 = scmp.eq.s32.totalorder %s20, 0
      %p82 = por %p80, %p81
      %s84 = sadd.s32 %s83, 1
      %p87 = scmp.eq.s32.totalorder %s14, 7
      %p88 = scmp.ne.s32.totalorder %s83, %s85
      %p89 = scmp.eq.s32.totalorder %s14, 0
      %p90 = por %p88, %p89
      %p91 = scmp.ne.s32.totalorder %s83, %s85
      %p92 = scmp.eq.s32.totalorder %s19, 7
      %p93 = por %p91, %p92
      %p94 = scmp.ne.s32.totalorder %s85, %s86
      %p95 = scmp.eq.s32.totalorder %s19, 0
      %p96 = por %p94, %p95
      %p97 = scmp.ne.s32.totalorder %s85, %s86
      %p98 = scmp.eq.s32.totalorder %s20, 7
      %p99 = por %p97, %p98
      %p101 = scmp.ne.s32.totalorder %s86, %s100
      %p102 = scmp.eq.s32.totalorder %s20, 0
      %p103 = por %p101, %p102
      %s105 = sadd.s32 %s104, 1
      %p108 = scmp.eq.s32.totalorder %s14, 7
      %p109 = scmp.ne.s32.totalorder %s104, %s106
      %p110 = scmp.eq.s32.totalorder %s14, 0
      %p111 = por %p109, %p110
      %p112 = scmp.ne.s32.totalorder %s104, %s106
      %p113 = scmp.eq.s32.totalorder %s19, 7
      %p114 = por %p112, %p113
      %p115 = scmp.ne.s32.totalorder %s106, %s107
      %p116 = scmp.eq.s32.totalorder %s19, 0
      %p117 = por %p115, %p116
      %p118 = scmp.ne.s32.totalorder %s106, %s107
      %p119 = scmp.eq.s32.totalorder %s20, 7
      %p120 = por %p118, %p119
      %p122 = scmp.ne.s32.totalorder %s107, %s121
      %p123 = scmp.eq.s32.totalorder %s20, 0
      %p124 = por %p122, %p123
      %s125 = ssub.s32 %s21, %s33
      %s126 = ssub.s32 %s22, %s29
      %s127 = sor.u32 %s125, %s126
      %p128 = scmp.eq.s32.totalorder %s127, 0
      %s130 = sadd.s32 %s129, 1
      %s131 = scalar_select %p128, %s129, %s130
      %p134 = pneg %p128
      %p135 = scmp.eq.s32.totalorder %s14, 7
      %p136 = por %p134, %p135
      %p137 = scmp.ne.s32.totalorder %s129, %s132
      %p138 = scmp.eq.s32.totalorder %s14, 0
      %p139 = por %p137, %p138
      %p140 = scmp.ne.s32.totalorder %s129, %s132
      %p141 = scmp.eq.s32.totalorder %s19, 7
      %p142 = por %p140, %p141
      %p143 = scmp.ne.s32.totalorder %s132, %s133
      %p144 = scmp.eq.s32.totalorder %s19, 0
      %p145 = por %p143, %p144
      %p146 = scmp.ne.s32.totalorder %s132, %s133
      %p147 = scmp.eq.s32.totalorder %s20, 7
      %p148 = por %p146, %p147
      %p150 = scmp.ne.s32.totalorder %s133, %s149
      %p151 = scmp.eq.s32.totalorder %s20, 0
      %p152 = por %p150, %p151
      %p153 = scmp.le.s32.totalorder 1, %s14
      %p154 = scmp.lt.s32.totalorder %s14, 9
      %p155 = pnand %p153, %p154
      %p156 = pneg %p155
      // Predicated region
      $region9: #{tpu_custom_call.1} parent=5 // pred_check
        _
      $region10: #{tpu_custom_call.1} parent=5 // pred_check_branch
        %158 = sbr.rel (%p155) target = $region12
      $region11: #{tpu_custom_call.1} parent=5 // pred_region
        %s159 = ssub.s32 %s14, 1
        // Predicated region
        $region13: #{tpu_custom_call.1} parent=11 // pred_check
          %p160 = pneg %p75
        $region14: #{tpu_custom_call.1} parent=11 // pred_check_branch
          %162 = sbr.rel (%p160) target = $region16
        $region15: #{tpu_custom_call.1} parent=11 // pred_region
          %164 = vsyncadd [#allocation5], 0
          %s165 = sshll.u32 %s1, 4
          %s166 = int_to_ptr.hbm [resolvable:$true] %s165
          %s167 = sshll.u32 [#allocation4], 4
          %s168 = int_to_ptr.vmem [resolvable:$true] %s167
          %173 = dma.hbm_to_vmem [thread:$0]  %s166, 256, %s168, [#allocation5], 128, 128, 8
        $region16: #{tpu_custom_call.1} parent=11 // pred_fallthru
          _
        // Predicated region
        $region17: #{tpu_custom_call.1} parent=11 // pred_check
          %p174 = pneg %p96
        $region18: #{tpu_custom_call.1} parent=11 // pred_check_branch
          %176 = sbr.rel (%p174) target = $region20
        $region19: #{tpu_custom_call.1} parent=11 // pred_region
          _
        $region20: #{tpu_custom_call.1} parent=11 // pred_fallthru
          _
        // Predicated region
        $region21: #{tpu_custom_call.1} parent=11 // pred_check
          %p177 = pneg %p117
        $region22: #{tpu_custom_call.1} parent=11 // pred_check_branch
          %179 = sbr.rel (%p177) target = $region24
        $region23: #{tpu_custom_call.1} parent=11 // pred_region
          _
        $region24: #{tpu_custom_call.1} parent=11 // pred_fallthru
          _
      $region12: #{tpu_custom_call.1} parent=5 // pred_fallthru
        _
      %p180 = scmp.lt.s32.totalorder %s14, 8
      // Predicated region
      $region25: #{tpu_custom_call.1} parent=5 // pred_check
        %p181 = pneg %p180
      $region26: #{tpu_custom_call.1} parent=5 // pred_check_branch
        %183 = sbr.rel (%p181) target = $region28
      $region27: #{tpu_custom_call.1} parent=5 // pred_region
        // Predicated region
        $region29: #{tpu_custom_call.1} parent=27 // pred_check
          %p184 = pneg %p48
        $region30: #{tpu_custom_call.1} parent=27 // pred_check_branch
          %186 = sbr.rel (%p184) target = $region32
        $region31: #{tpu_custom_call.1} parent=27 // pred_region
          %s187 = sand.u32 %s38, 1
          %s188 = scalar_lea.sflag [#allocation3], %s187
          %s189 = sand.u32 %s38, 1
          %s190 = smul.addr %s189, 128
          %s191 = scalar_lea.vmem [#allocation2], %s190
          %s192 = smul.u32 8, %s22
          %194 = vsyncadd %s188, 0
          %s195 = smul.addr %s192, 2
          %s196 = smul.addr %s21, 16
          %s197 = sadd.s32 %s195, %s196
          %s198 = smul.addr %s197, 8
          %s199 = scalar_lea.hbm %s0, %s198
          %s200 = sshll.u32 %s199, 4
          %s201 = int_to_ptr.hbm [resolvable:$true] %s200
          %s202 = sshll.u32 %s191, 4
          %s203 = int_to_ptr.vmem [resolvable:$true] %s202
          %208 = dma.hbm_to_vmem [thread:$0]  %s201, 2048, %s203, %s188, 128, 128, 8
        $region32: #{tpu_custom_call.1} parent=27 // pred_fallthru
          _
      $region28: #{tpu_custom_call.1} parent=5 // pred_fallthru
        _
      %p209 = scmp.le.s32.totalorder 1, %s14
      %p210 = scmp.lt.s32.totalorder %s14, 9
      %p211 = pnand %p209, %p210
      %p212 = pneg %p211
      // Predicated region
      $region33: #{tpu_custom_call.1} parent=5 // pred_check
        _
      $region34: #{tpu_custom_call.1} parent=5 // pred_check_branch
        %214 = sbr.rel (%p211) target = $region36
      $region35: #{tpu_custom_call.1} parent=5 // pred_region
        %s215 = ssub.s32 %s14, 1
        %s216 = sand.u32 %s41, 1
        %s217 = scalar_lea.sflag [#allocation3], %s216
        %s218 = sand.u32 %s41, 1
        %s219 = smul.addr %s218, 128
        %s220 = scalar_lea.vmem [#allocation2], %s219
        // Predicated region
        $region37: #{tpu_custom_call.1} parent=35 // pred_check
          %p221 = pneg %p54
        $region38: #{tpu_custom_call.1} parent=35 // pred_check_branch
          %223 = sbr.rel (%p221) target = $region40
        $region39: #{tpu_custom_call.1} parent=35 // pred_region
          %225 = dma.done %s217, 2048
        $region40: #{tpu_custom_call.1} parent=35 // pred_fallthru
          _
        // Predicated region
        $region41: #{tpu_custom_call.1} parent=35 // pred_check
          %p226 = pneg %p75
        $region42: #{tpu_custom_call.1} parent=35 // pred_check_branch
          %228 = sbr.rel (%p226) target = $region44
        $region43: #{tpu_custom_call.1} parent=35 // pred_region
          %230 = dma.done [#allocation5], 256
        $region44: #{tpu_custom_call.1} parent=35 // pred_fallthru
          _
        %s231 = sand.u32 %s41, 1
        %s232 = scalar_lea.sflag [#allocation3], %s231
        %s233 = sand.u32 %s41, 1
        %s234 = smul.addr %s233, 128
        %s235 = scalar_lea.vmem [#allocation2], %s234
        %p236 = pneg %p54
        %p237 = pneg %p51
        %p238 = pneg %p75
        %p239 = pneg %p72
        %p240 = pneg %p96
        %p241 = pneg %p93
        %p242 = pneg %p117
        %p243 = pneg %p114
        %p244 = pneg %p145
        %p245 = pneg %p142
        %s246 = smul.u32 8, %s24
        %p247 = scmp.lt.s32.totalorder %s23, 7
        %s248 = scalar_select %p247, %s23, 7
        %p249 = scmp.lt.s32.totalorder %s246, 7
        %s250 = scalar_select %p249, %s246, 7
        %s251 = smul.addr %s248, 8
        %s252 = sadd.s32 %s250, %s251
        %s253 = smul.addr %s252, 8
        %s254 = scalar_lea.vmem %s4, %s253
        %s255 = smul.u32 8, %s24
        %s256 = smul.u32 8, %s24
        %p257 = scmp.lt.s32.totalorder %s23, 7
        %s258 = scalar_select %p257, %s23, 7
        %p259 = scmp.lt.s32.totalorder %s256, 7
        %s260 = scalar_select %p259, %s256, 7
        %s261 = smul.addr %s258, 8
        %s262 = sadd.s32 %s260, %s261
        %s263 = smul.addr %s262, 8
        %s264 = scalar_lea.vmem %s4, %s263
        %s265 = smul.u32 8, %s24
        %v266 = vld [vmem:[%s220] sm:$0xff]
        %v267 = vld [vmem:[%s220 + $0x10] sm:$0xff]
        %v268 = vld [vmem:[%s220 + $0x20] sm:$0xff]
        %v269 = vld [vmem:[%s220 + $0x30] sm:$0xff]
        %v270 = vld [vmem:[%s220 + $0x40] sm:$0xff]
        %v271 = vld [vmem:[%s220 + $0x50] sm:$0xff]
        %v272 = vld [vmem:[%s220 + $0x60] sm:$0xff]
        %v273 = vld [vmem:[%s220 + $0x70] sm:$0xff]
        %vm274 = vcmask 64512
        %v275 = vsel %vm274, %v266, 0.0
        %276 = vadd.xlane.f32.xlu0 %v275
        %v277 = vpop.xlane.xlu0 %276
        %v278 = vsel %vm274, %v267, 0.0
        %279 = vadd.xlane.f32.xlu0 %v278
        %v280 = vpop.xlane.xlu0 %279
        %v281 = vsel %vm274, %v268, 0.0
        %282 = vadd.xlane.f32.xlu0 %v281
        %v283 = vpop.xlane.xlu0 %282
        %v284 = vsel %vm274, %v269, 0.0
        %285 = vadd.xlane.f32.xlu0 %v284
        %v286 = vpop.xlane.xlu0 %285
        %v287 = vsel %vm274, %v270, 0.0
        %288 = vadd.xlane.f32.xlu0 %v287
        %v289 = vpop.xlane.xlu0 %288
        %v290 = vsel %vm274, %v271, 0.0
        %291 = vadd.xlane.f32.xlu0 %v290
        %v292 = vpop.xlane.xlu0 %291
        %v293 = vsel %vm274, %v272, 0.0
        %294 = vadd.xlane.f32.xlu0 %v293
        %v295 = vpop.xlane.xlu0 %294
        %v296 = vsel %vm274, %v273, 0.0
        %297 = vadd.xlane.f32.xlu0 %v296
        %v298 = vpop.xlane.xlu0 %297
        %v299 = vadd.f32 %v277, 0.0
        %v300 = vadd.f32 %v280, 0.0
        %v301 = vadd.f32 %v283, 0.0
        %v302 = vadd.f32 %v286, 0.0
        %v303 = vadd.f32 %v289, 0.0
        %v304 = vadd.f32 %v292, 0.0
        %v305 = vadd.f32 %v295, 0.0
        %v306 = vadd.f32 %v298, 0.0
        %v307 = vmul.f32 %v266, %v266
        %v308 = vmul.f32 %v267, %v267
        %v309 = vmul.f32 %v268, %v268
        %v310 = vmul.f32 %v269, %v269
        %v311 = vmul.f32 %v270, %v270
        %v312 = vmul.f32 %v271, %v271
        %v313 = vmul.f32 %v272, %v272
        %v314 = vmul.f32 %v273, %v273
        %v315 = vsel %vm274, %v307, 0.0
        %316 = vadd.xlane.f32.xlu0 %v315
        %v317 = vpop.xlane.xlu0 %316
        %v318 = vsel %vm274, %v308, 0.0
        %319 = vadd.xlane.f32.xlu0 %v318
        %v320 = vpop.xlane.xlu0 %319
        %v321 = vsel %vm274, %v309, 0.0
        %322 = vadd.xlane.f32.xlu0 %v321
        %v323 = vpop.xlane.xlu0 %322
        %v324 = vsel %vm274, %v310, 0.0
        %325 = vadd.xlane.f32.xlu0 %v324
        %v326 = vpop.xlane.xlu0 %325
        %v327 = vsel %vm274, %v311, 0.0
        %328 = vadd.xlane.f32.xlu0 %v327
        %v329 = vpop.xlane.xlu0 %328
        %v330 = vsel %vm274, %v312, 0.0
        %331 = vadd.xlane.f32.xlu0 %v330
        %v332 = vpop.xlane.xlu0 %331
        %v333 = vsel %vm274, %v313, 0.0
        %334 = vadd.xlane.f32.xlu0 %v333
        %v335 = vpop.xlane.xlu0 %334
        %v336 = vsel %vm274, %v314, 0.0
        %337 = vadd.xlane.f32.xlu0 %v336
        %v338 = vpop.xlane.xlu0 %337
        %v339 = vadd.f32 %v317, 0.0
        %v340 = vadd.f32 %v320, 0.0
        %v341 = vadd.f32 %v323, 0.0
        %v342 = vadd.f32 %v326, 0.0
        %v343 = vadd.f32 %v329, 0.0
        %v344 = vadd.f32 %v332, 0.0
        %v345 = vadd.f32 %v335, 0.0
        %v346 = vadd.f32 %v338, 0.0
        %v347 = vld [vmem:[#allocation4] sm:$0xff]
        %s348 = scalar_lea.vmem %s220, 8 [#allocation2]
        %v349 = vld [vmem:[%s348] sm:$0xff]
        %v350 = vld [vmem:[%s348 + $0x10] sm:$0xff]
        %v351 = vld [vmem:[%s348 + $0x20] sm:$0xff]
        %v352 = vld [vmem:[%s348 + $0x30] sm:$0xff]
        %v353 = vld [vmem:[%s348 + $0x40] sm:$0xff]
        %v354 = vld [vmem:[%s348 + $0x50] sm:$0xff]
        %v355 = vld [vmem:[%s348 + $0x60] sm:$0xff]
        %v356 = vld [vmem:[%s348 + $0x70] sm:$0xff]
        %v357 = vsel %vm274, %v349, 0.0
        %358 = vadd.xlane.f32.xlu0 %v357
        %v359 = vpop.xlane.xlu0 %358
        %v360 = vsel %vm274, %v350, 0.0
        %361 = vadd.xlane.f32.xlu0 %v360
        %v362 = vpop.xlane.xlu0 %361
        %v363 = vsel %vm274, %v351, 0.0
        %364 = vadd.xlane.f32.xlu0 %v363
        %v365 = vpop.xlane.xlu0 %364
        %v366 = vsel %vm274, %v352, 0.0
        %367 = vadd.xlane.f32.xlu0 %v366
        %v368 = vpop.xlane.xlu0 %367
        %v369 = vsel %vm274, %v353, 0.0
        %370 = vadd.xlane.f32.xlu0 %v369
        %v371 = vpop.xlane.xlu0 %370
        %v372 = vsel %vm274, %v354, 0.0
        %373 = vadd.xlane.f32.xlu0 %v372
        %v374 = vpop.xlane.xlu0 %373
        %v375 = vsel %vm274, %v355, 0.0
        %376 = vadd.xlane.f32.xlu0 %v375
        %v377 = vpop.xlane.xlu0 %376
        %v378 = vsel %vm274, %v356, 0.0
        %379 = vadd.xlane.f32.xlu0 %v378
        %v380 = vpop.xlane.xlu0 %379
        %v381 = vadd.f32 %v299, %v359
        %v382 = vadd.f32 %v300, %v362
        %v383 = vadd.f32 %v301, %v365
        %v384 = vadd.f32 %v302, %v368
        %v385 = vadd.f32 %v303, %v371
        %v386 = vadd.f32 %v304, %v374
        %v387 = vadd.f32 %v305, %v377
        %v388 = vadd.f32 %v306, %v380
        %v389 = vmul.f32 %v349, %v349
        %v390 = vmul.f32 %v350, %v350
        %v391 = vmul.f32 %v351, %v351
        %v392 = vmul.f32 %v352, %v352
        %v393 = vmul.f32 %v353, %v353
        %v394 = vmul.f32 %v354, %v354
        %v395 = vmul.f32 %v355, %v355
        %v396 = vmul.f32 %v356, %v356
        %v397 = vsel %vm274, %v389, 0.0
        %398 = vadd.xlane.f32.xlu0 %v397
        %v399 = vpop.xlane.xlu0 %398
        %v400 = vsel %vm274, %v390, 0.0
        %401 = vadd.xlane.f32.xlu0 %v400
        %v402 = vpop.xlane.xlu0 %401
        %v403 = vsel %vm274, %v391, 0.0
        %404 = vadd.xlane.f32.xlu0 %v403
        %v405 = vpop.xlane.xlu0 %404
        %v406 = vsel %vm274, %v392, 0.0
        %407 = vadd.xlane.f32.xlu0 %v406
        %v408 = vpop.xlane.xlu0 %407
        %v409 = vsel %vm274, %v393, 0.0
        %410 = vadd.xlane.f32.xlu0 %v409
        %v411 = vpop.xlane.xlu0 %410
        %v412 = vsel %vm274, %v394, 0.0
        %413 = vadd.xlane.f32.xlu0 %v412
        %v414 = vpop.xlane.xlu0 %413
        %v415 = vsel %vm274, %v395, 0.0
        %416 = vadd.xlane.f32.xlu0 %v415
        %v417 = vpop.xlane.xlu0 %416
        %v418 = vsel %vm274, %v396, 0.0
        %419 = vadd.xlane.f32.xlu0 %v418
        %v420 = vpop.xlane.xlu0 %419
        %v421 = vadd.f32 %v339, %v399
        %v422 = vadd.f32 %v340, %v402
        %v423 = vadd.f32 %v341, %v405
        %v424 = vadd.f32 %v342, %v408
        %v425 = vadd.f32 %v343, %v411
        %v426 = vadd.f32 %v344, %v414
        %v427 = vadd.f32 %v345, %v417
        %v428 = vadd.f32 %v346, %v420
        %s429 = scalar_lea.vmem [#allocation4], 8
        %v430 = vld [vmem:[%s429] sm:$0xff]
        %v432 = vsel %vm274, %v349, 0
        %v435 = vsel %vm274, %v350, 0
        %v438 = vsel %vm274, %v351, 0
        %v441 = vsel %vm274, %v352, 0
        %v444 = vsel %vm274, %v353, 0
        %v447 = vsel %vm274, %v354, 0
        %v450 = vsel %vm274, %v355, 0
        %v453 = vsel %vm274, %v356, 0
        %455 = vmatpush.msra.mxu0 0.0
        %456 = vmatpush.msra.mxu0 0.0
        %457 = vmatpush.msra.mxu0 0.0
        %458 = vmatpush.msra.mxu0 0.0
        %459 = vmatpush.msra.mxu0 0.0
        %460 = vmatpush.msra.mxu0 0.0
        %461 = vmatpush.msra.mxu0 0.0
        %462 = vmatpush.msra.mxu0 0.0
        %463 = vmatpush.msra.mxu0 0.0
        %464 = vmatpush.msra.mxu0 0.0
        %465 = vmatpush.msra.mxu0 0.0
        %466 = vmatpush.msra.mxu0 0.0
        %467 = vmatpush.msra.mxu0 0.0
        %468 = vmatpush.msra.mxu0 0.0
        %469 = vmatpush.msra.mxu0 0.0
        %470 = vmatpush.msra.mxu0 %v430
        %471 = vmatmul.f32.gmra.mxu0 %v432
        %v472 = vpop.f32.mrf.mxu0
        %v473 = vadd.f32 0.0, %v472
        %474 = vmatmul.f32.gmra.mxu0 %v435
        %v475 = vpop.f32.mrf.mxu0
        %v476 = vadd.f32 0.0, %v475
        %477 = vmatmul.f32.gmra.mxu0 %v438
        %v478 = vpop.f32.mrf.mxu0
        %v479 = vadd.f32 0.0, %v478
        %480 = vmatmul.f32.gmra.mxu0 %v441
        %v481 = vpop.f32.mrf.mxu0
        %v482 = vadd.f32 0.0, %v481
        %483 = vmatmul.f32.gmra.mxu0 %v444
        %v484 = vpop.f32.mrf.mxu0
        %v485 = vadd.f32 0.0, %v484
        %486 = vmatmul.f32.gmra.mxu0 %v447
        %v487 = vpop.f32.mrf.mxu0
        %v488 = vadd.f32 0.0, %v487
        %489 = vmatmul.f32.gmra.mxu0 %v450
        %v490 = vpop.f32.mrf.mxu0
        %v491 = vadd.f32 0.0, %v490
        %492 = vmatmul.f32.gmra.mxu0 %v453
        %v493 = vpop.f32.mrf.mxu0
        %v494 = vadd.f32 0.0, %v493
        %495 = vdwg.mxu0
        %v497 = vsel %vm274, %v266, 0
        %v500 = vsel %vm274, %v267, 0
        %v503 = vsel %vm274, %v268, 0
        %v506 = vsel %vm274, %v269, 0
        %v509 = vsel %vm274, %v270, 0
        %v512 = vsel %vm274, %v271, 0
        %v515 = vsel %vm274, %v272, 0
        %v518 = vsel %vm274, %v273, 0
        %520 = vmatpush.msra.mxu0 0.0
        %521 = vmatpush.msra.mxu0 0.0
        %522 = vmatpush.msra.mxu0 0.0
        %523 = vmatpush.msra.mxu0 0.0
        %524 = vmatpush.msra.mxu0 0.0
        %525 = vmatpush.msra.mxu0 0.0
        %526 = vmatpush.msra.mxu0 0.0
        %527 = vmatpush.msra.mxu0 0.0
        %528 = vmatpush.msra.mxu0 0.0
        %529 = vmatpush.msra.mxu0 0.0
        %530 = vmatpush.msra.mxu0 0.0
        %531 = vmatpush.msra.mxu0 0.0
        %532 = vmatpush.msra.mxu0 0.0
        %533 = vmatpush.msra.mxu0 0.0
        %534 = vmatpush.msra.mxu0 0.0
        %535 = vmatpush.msra.mxu0 %v347
        %536 = vmatmul.f32.gmra.mxu0 %v497
        %v537 = vpop.f32.mrf.mxu0
        %v538 = vadd.f32 %v473, %v537
        %539 = vmatmul.f32.gmra.mxu0 %v500
        %v540 = vpop.f32.mrf.mxu0
        %v541 = vadd.f32 %v476, %v540
        %542 = vmatmul.f32.gmra.mxu0 %v503
        %v543 = vpop.f32.mrf.mxu0
        %v544 = vadd.f32 %v479, %v543
        %545 = vmatmul.f32.gmra.mxu0 %v506
        %v546 = vpop.f32.mrf.mxu0
        %v547 = vadd.f32 %v482, %v546
        %548 = vmatmul.f32.gmra.mxu0 %v509
        %v549 = vpop.f32.mrf.mxu0
        %v550 = vadd.f32 %v485, %v549
        %551 = vmatmul.f32.gmra.mxu0 %v512
        %v552 = vpop.f32.mrf.mxu0
        %v553 = vadd.f32 %v488, %v552
        %554 = vmatmul.f32.gmra.mxu0 %v515
        %v555 = vpop.f32.mrf.mxu0
        %v556 = vadd.f32 %v491, %v555
        %557 = vmatmul.f32.gmra.mxu0 %v518
        %v558 = vpop.f32.mrf.mxu0
        %v559 = vadd.f32 %v494, %v558
        %560 = vdwg.mxu0
        %v561 = vmul.f32 %v381, 0.0625
        %v562 = vmul.f32 %v382, 0.0625
        %v563 = vmul.f32 %v383, 0.0625
        %v564 = vmul.f32 %v384, 0.0625
        %v565 = vmul.f32 %v385, 0.0625
        %v566 = vmul.f32 %v386, 0.0625
        %v567 = vmul.f32 %v387, 0.0625
        %v568 = vmul.f32 %v388, 0.0625
        %v569 = vmul.f32 %v421, 0.0625
        %v570 = vmul.f32 %v422, 0.0625
        %v571 = vmul.f32 %v423, 0.0625
        %v572 = vmul.f32 %v424, 0.0625
        %v573 = vmul.f32 %v425, 0.0625
        %v574 = vmul.f32 %v426, 0.0625
        %v575 = vmul.f32 %v427, 0.0625
        %v576 = vmul.f32 %v428, 0.0625
        %v577 = vmul.f32 %v561, %v561
        %v578 = vmul.f32 %v562, %v562
        %v579 = vmul.f32 %v563, %v563
        %v580 = vmul.f32 %v564, %v564
        %v581 = vmul.f32 %v565, %v565
        %v582 = vmul.f32 %v566, %v566
        %v583 = vmul.f32 %v567, %v567
        %v584 = vmul.f32 %v568, %v568
        %v585 = vsub.f32 %v569, %v577
        %v586 = vsub.f32 %v570, %v578
        %v587 = vsub.f32 %v571, %v579
        %v588 = vsub.f32 %v572, %v580
        %v589 = vsub.f32 %v573, %v581
        %v590 = vsub.f32 %v574, %v582
        %v591 = vsub.f32 %v575, %v583
        %v592 = vsub.f32 %v576, %v584
        %v593 = vadd.f32 %v585, 1e-05
        %v594 = vadd.f32 %v586, 1e-05
        %v595 = vadd.f32 %v587, 1e-05
        %v596 = vadd.f32 %v588, 1e-05
        %v597 = vadd.f32 %v589, 1e-05
        %v598 = vadd.f32 %v590, 1e-05
        %v599 = vadd.f32 %v591, 1e-05
        %v600 = vadd.f32 %v592, 1e-05
        %v601 = vrsqrt.pop %v593
        %v602 = vmul.f32 %v601, %v593
        %v603 = vmul.f32 %v602, %v601
        %v604 = vmul.f32 0.5, %v603
        %v605 = vsub.f32 1.5, %v604
        %v606 = vmul.f32 %v601, %v605
        %vm607 = vweird.f32 %v593
        %vm608 = vweird.f32 %v601
        %vm609 = vmor %vm607, %vm608
        %v610 = vsel %vm609, %v601, %v606
        %v611 = vrsqrt.pop %v594
        %v612 = vmul.f32 %v611, %v594
        %v613 = vmul.f32 %v612, %v611
        %v614 = vmul.f32 0.5, %v613
        %v615 = vsub.f32 1.5, %v614
        %v616 = vmul.f32 %v611, %v615
        %vm617 = vweird.f32 %v594
        %vm618 = vweird.f32 %v611
        %vm619 = vmor %vm617, %vm618
        %v620 = vsel %vm619, %v611, %v616
        %v621 = vrsqrt.pop %v595
        %v622 = vmul.f32 %v621, %v595
        %v623 = vmul.f32 %v622, %v621
        %v624 = vmul.f32 0.5, %v623
        %v625 = vsub.f32 1.5, %v624
        %v626 = vmul.f32 %v621, %v625
        %vm627 = vweird.f32 %v595
        %vm628 = vweird.f32 %v621
        %vm629 = vmor %vm627, %vm628
        %v630 = vsel %vm629, %v621, %v626
        %v631 = vrsqrt.pop %v596
        %v632 = vmul.f32 %v631, %v596
        %v633 = vmul.f32 %v632, %v631
        %v634 = vmul.f32 0.5, %v633
        %v635 = vsub.f32 1.5, %v634
        %v636 = vmul.f32 %v631, %v635
        %vm637 = vweird.f32 %v596
        %vm638 = vweird.f32 %v631
        %vm639 = vmor %vm637, %vm638
        %v640 = vsel %vm639, %v631, %v636
        %v641 = vrsqrt.pop %v597
        %v642 = vmul.f32 %v641, %v597
        %v643 = vmul.f32 %v642, %v641
        %v644 = vmul.f32 0.5, %v643
        %v645 = vsub.f32 1.5, %v644
        %v646 = vmul.f32 %v641, %v645
        %vm647 = vweird.f32 %v597
        %vm648 = vweird.f32 %v641
        %vm649 = vmor %vm647, %vm648
        %v650 = vsel %vm649, %v641, %v646
        %v651 = vrsqrt.pop %v598
        %v652 = vmul.f32 %v651, %v598
        %v653 = vmul.f32 %v652, %v651
        %v654 = vmul.f32 0.5, %v653
        %v655 = vsub.f32 1.5, %v654
        %v656 = vmul.f32 %v651, %v655
        %vm657 = vweird.f32 %v598
        %vm658 = vweird.f32 %v651
        %vm659 = vmor %vm657, %vm658
        %v660 = vsel %vm659, %v651, %v656
        %v661 = vrsqrt.pop %v599
        %v662 = vmul.f32 %v661, %v599
        %v663 = vmul.f32 %v662, %v661
        %v664 = vmul.f32 0.5, %v663
        %v665 = vsub.f32 1.5, %v664
        %v666 = vmul.f32 %v661, %v665
        %vm667 = vweird.f32 %v599
        %vm668 = vweird.f32 %v661
        %vm669 = vmor %vm667, %vm668
        %v670 = vsel %vm669, %v661, %v666
        %v671 = vrsqrt.pop %v600
        %v672 = vmul.f32 %v671, %v600
        %v673 = vmul.f32 %v672, %v671
        %v674 = vmul.f32 0.5, %v673
        %v675 = vsub.f32 1.5, %v674
        %v676 = vmul.f32 %v671, %v675
        %vm677 = vweird.f32 %v600
        %vm678 = vweird.f32 %v671
        %vm679 = vmor %vm677, %vm678
        %v680 = vsel %vm679, %v671, %v676
        %v681 = vmul.f32 %v610, %v538
        %v682 = vmul.f32 %v620, %v541
        %v683 = vmul.f32 %v630, %v544
        %v684 = vmul.f32 %v640, %v547
        %v685 = vmul.f32 %v650, %v550
        %v686 = vmul.f32 %v660, %v553
        %v687 = vmul.f32 %v670, %v556
        %v688 = vmul.f32 %v680, %v559
        %v689 = vmul.f32 %v610, %v561
        %v690 = vmul.f32 %v620, %v562
        %v691 = vmul.f32 %v630, %v563
        %v692 = vmul.f32 %v640, %v564
        %v693 = vmul.f32 %v650, %v565
        %v694 = vmul.f32 %v660, %v566
        %v695 = vmul.f32 %v670, %v567
        %v696 = vmul.f32 %v680, %v568
        %v697 = vld [vmem:[%s2] sm:$0x1]
        %v699 = vperm.slane %v697, 0
        %v701 = vmul.f32 %v689, %v699
        %v702 = vmul.f32 %v690, %v699
        %v703 = vmul.f32 %v691, %v699
        %v704 = vmul.f32 %v692, %v699
        %v705 = vmul.f32 %v693, %v699
        %v706 = vmul.f32 %v694, %v699
        %v707 = vmul.f32 %v695, %v699
        %v708 = vmul.f32 %v696, %v699
        %v709 = vsub.f32 %v681, %v701
        %v710 = vsub.f32 %v682, %v702
        %v711 = vsub.f32 %v683, %v703
        %v712 = vsub.f32 %v684, %v704
        %v713 = vsub.f32 %v685, %v705
        %v714 = vsub.f32 %v686, %v706
        %v715 = vsub.f32 %v687, %v707
        %v716 = vsub.f32 %v688, %v708
        %v717 = vld [vmem:[%s3] sm:$0x1]
        %v719 = vperm.slane %v717, 0
        %v721 = vadd.f32 %v709, %v719
        %v722 = vadd.f32 %v710, %v719
        %v723 = vadd.f32 %v711, %v719
        %v724 = vadd.f32 %v712, %v719
        %v725 = vadd.f32 %v713, %v719
        %v726 = vadd.f32 %v714, %v719
        %v727 = vadd.f32 %v715, %v719
        %v728 = vadd.f32 %v716, %v719
        %729 = vst.msk [vmem:[%s264] sm:$0xff] %vm274, %v721
        %730 = vst.msk [vmem:[%s264 + $0x8] sm:$0xff] %vm274, %v722
        %731 = vst.msk [vmem:[%s264 + $0x10] sm:$0xff] %vm274, %v723
        %732 = vst.msk [vmem:[%s264 + $0x18] sm:$0xff] %vm274, %v724
        %733 = vst.msk [vmem:[%s264 + $0x20] sm:$0xff] %vm274, %v725
        %734 = vst.msk [vmem:[%s264 + $0x28] sm:$0xff] %vm274, %v726
        %735 = vst.msk [vmem:[%s264 + $0x30] sm:$0xff] %vm274, %v727
        %736 = vst.msk [vmem:[%s264 + $0x38] sm:$0xff] %vm274, %v728
        %s737 = smul.u32 8, %s24
        %p738 = scmp.lt.s32.totalorder %s23, 7
        %s739 = scalar_select %p738, %s23, 7
        %p740 = scmp.lt.s32.totalorder %s737, 7
        %s741 = scalar_select %p740, %s737, 7
        %s742 = smul.addr %s739, 8
        %s743 = sadd.s32 %s741, %s742
        %s744 = smul.addr %s743, 8
        %s745 = scalar_lea.vmem %s4, %s744
        // Predicated region
        $region45: #{tpu_custom_call.1} parent=35 // pred_check
          %p746 = pneg %p142
        $region46: #{tpu_custom_call.1} parent=35 // pred_check_branch
          %748 = sbr.rel (%p746) target = $region48
        $region47: #{tpu_custom_call.1} parent=35 // pred_region
          %s749 = smul.u32 8, %s24
        $region48: #{tpu_custom_call.1} parent=35 // pred_fallthru
          _
      $region36: #{tpu_custom_call.1} parent=5 // pred_fallthru
        _
      %p750 = scmp.le.s32.totalorder 2, %s14
      // Predicated region
      $region49: #{tpu_custom_call.1} parent=5 // pred_check
        %p751 = pneg %p750
      $region50: #{tpu_custom_call.1} parent=5 // pred_check_branch
        %753 = sbr.rel (%p751) target = $region52
      $region51: #{tpu_custom_call.1} parent=5 // pred_region
        %s754 = ssub.s32 %s14, 2
        // Predicated region
        $region53: #{tpu_custom_call.1} parent=51 // pred_check
          %p755 = pneg %p148
        $region54: #{tpu_custom_call.1} parent=51 // pred_check_branch
          %757 = sbr.rel (%p755) target = $region56
        $region55: #{tpu_custom_call.1} parent=51 // pred_region
          %s758 = smul.u32 8, %s26
          %p759 = scmp.lt.s32.totalorder %s25, 7
          %s760 = scalar_select %p759, %s25, 7
          %p761 = scmp.lt.s32.totalorder %s758, 7
          %s762 = scalar_select %p761, %s758, 7
          %s763 = smul.addr %s760, 8
          %s764 = sadd.s32 %s762, %s763
          %s765 = smul.addr %s764, 8
          %s766 = scalar_lea.vmem %s4, %s765
        $region56: #{tpu_custom_call.1} parent=51 // pred_fallthru
          _
      $region52: #{tpu_custom_call.1} parent=5 // pred_fallthru
        _
    $region6: #{tpu_custom_call.1} parent=1 // loop_footer
      %s18 = sadd.s32 1, %s14
    $region7: #{tpu_custom_call.1} parent=1 // loop_footer_branch
      %13 = sbr.rel target = $region3
    $region8: #{tpu_custom_call.1} parent=1 // loop_exit
      _
    %767 = vsyncpa [#allocation3], 1
    %s768 = scalar_lea.sflag [#allocation3], 1
    %769 = vsyncpa %s768, 1
    %770 = vsyncpa [#allocation5], 1

</llo_original>
